<compile_context>
chip_gen: v6e
topology: v6e:2x2x1
jax: 0.10.0
libtpu: 0.0.40
codegen_flags: <defaults>
</compile_context>

<pallas_src>
import jax
import jax.numpy as jnp
from jax.experimental import pallas as pl
from jax.experimental.pallas import tpu as pltpu

LN_EPS = 1e-6


def _round_up(n, m):
    return ((n + m - 1) // m) * m


# ----------------------------------------------------------------------------
# Kernels
# ----------------------------------------------------------------------------
def ffn_kernel_fused(x_ref, w1_ref, b1_ref, w2_ref, b2_ref, gamma_ref, beta_ref,
                     o_ref):
    """Weights fully VMEM-resident: one grid step per row tile, no scratch."""
    # Read + convert x once; reused for both LayerNorm and the residual.
    x = x_ref[...].astype(jnp.float32)
    mean = jnp.mean(x, axis=-1, keepdims=True)
    centered = x - mean
    var = jnp.mean(centered * centered, axis=-1, keepdims=True)
    xn = centered * jax.lax.rsqrt(var + LN_EPS)
    xn = xn * gamma_ref[...] + beta_ref[...]

    # h = relu(xn @ W1 + b1)        (bf16 operands, f32 accumulation)
    h = jnp.dot(xn.astype(w1_ref.dtype), w1_ref[...],
                preferred_element_type=jnp.float32)
    h = jnp.maximum(h + b1_ref[...], 0.0)

    # y = h @ W2 + b2 + residual    (bf16 operands, f32 accumulation)
    y = jnp.dot(h.astype(w2_ref.dtype), w2_ref[...],
                preferred_element_type=jnp.float32)
    o_ref[...] = (y + b2_ref[...] + x).astype(o_ref.dtype)


def ffn_kernel_stream(x_ref, w1_ref, b1_ref, w2_ref, b2_ref, gamma_ref, beta_ref,
                      o_ref, xn_sc, acc_sc):
    """One (row-tile i, d_ff-tile j) grid step.  j is the reduction axis."""
    j = pl.program_id(1)

    @pl.when(j == 0)
    def _():
        # LayerNorm in f32 (XLU reductions + EUP rsqrt; cheap next to the MXU).
        x = x_ref[...].astype(jnp.float32)
        mean = jnp.mean(x, axis=-1, keepdims=True)
        centered = x - mean
        var = jnp.mean(centered * centered, axis=-1, keepdims=True)
        xn = centered * jax.lax.rsqrt(var + LN_EPS)
        xn = xn * gamma_ref[...] + beta_ref[...]
        # Cache the LN output once per row tile in the MXU input dtype (bf16).
        xn_sc[...] = xn.astype(xn_sc.dtype)

    # h_j = relu(xn @ W1[:, j_tile] + b1[j_tile])   (bf16 operands, f32 acc)
    h = jnp.dot(xn_sc[...], w1_ref[...], preferred_element_type=jnp.float32)
    h = jnp.maximum(h + b1_ref[...], 0.0)

    # partial_j = h_j @ W2[j_tile, :]               (bf16 operands, f32 acc)
    partial = jnp.dot(h.astype(w2_ref.dtype), w2_ref[...],
                      preferred_element_type=jnp.float32)

    # Direct write on the first reduction step (no zero store, no RMW), then add.
    @pl.when(j == 0)
    def _():
        acc_sc[...] = partial

    @pl.when(j > 0)
    def _():
        acc_sc[...] += partial

    @pl.when(j == pl.num_programs(1) - 1)
    def _():
        # Bias + residual in f32, then cast to the output dtype.  The x block
        # index is constant in j, so this read hits the already-resident tile.
        y = acc_sc[...] + b2_ref[...] + x_ref[...].astype(jnp.float32)
        o_ref[...] = y.astype(o_ref.dtype)


# ----------------------------------------------------------------------------
# VMEM planning
# ----------------------------------------------------------------------------
def _vmem_capacity_bytes():
    try:
        info = pltpu.get_tpu_info()
        cap = getattr(info, "vmem_capacity_bytes", None)
        if cap:
            return int(cap)
    except Exception:
        pass
    return 64 << 20   # conservative default: v7x per-TC VMEM


def _resident_vmem(tm, d_model, d_ff, x_bytes, w_bytes, weight_bufs):
    act_io = 2 * 2 * tm * d_model * x_bytes                    # x + out, double-buffered
    weights = weight_bufs * 2 * d_model * d_ff * w_bytes       # W1 + W2, resident
    inter = tm * d_ff * (4 + w_bytes) + tm * d_model * 8       # h (f32 + cast), xn/y f32
    small = 4 * (d_ff + 3 * d_model) * 4
    return act_io + weights + inter + small


def _stream_vmem(tm, tf, d_model, x_bytes, w_bytes, xn_bytes):
    act_io = 2 * 2 * tm * d_model * x_bytes                    # x + out, double-buffered
    weights = 2 * 2 * d_model * tf * w_bytes                   # W1/W2 slabs, double-buffered
    scratch = tm * d_model * (xn_bytes + 4)                    # xn_sc + acc_sc
    inter = tm * tf * (4 + w_bytes) + tm * d_model * 4         # h (f32 + cast), y f32
    small = 4 * (tf + 3 * d_model) * 4
    return act_io + weights + scratch + inter + small


def _select_config(rows, d_model, d_ff, x_bytes, w_bytes, xn_bytes,
                   tm_req, tf_req, plan_budget, allow_resident, weight_bufs):
    """Return (tm, tf, resident)."""
    row_cap = _round_up(rows, 8)
    tm_top = max(8, min(_round_up(tm_req, 8), row_cap))
    tm_cands = [tm_top] + [t for t in (1024, 768, 512, 384, 256, 128, 64, 32, 16, 8)
                           if t < tm_top]

    if allow_resident:
        for t in tm_cands:
            if _resident_vmem(t, d_model, d_ff, x_bytes, w_bytes,
                              weight_bufs) <= plan_budget:
                return t, d_ff, True

    # Streaming: tf must be a lane-aligned divisor of (padded) d_ff, <= request.
    tf_cap = max(128, min(_round_up(tf_req, 128), d_ff))
    tf_cands = [t for t in range(d_ff, 0, -128) if d_ff % t == 0 and t <= tf_cap]
    if not tf_cands:
        tf_cands = [128]
    for t in tm_cands:            # prioritize tm (arithmetic intensity vs weights)
        for f in tf_cands:        # then the largest feasible tf
            if _stream_vmem(t, f, d_model, x_bytes, w_bytes, xn_bytes) <= plan_budget:
                return t, f, False
    # Nothing fits the planning budget; smallest tiles, let the compiler try.
    return 8, tf_cands[-1], False


# ----------------------------------------------------------------------------
# Wrapper
# ----------------------------------------------------------------------------
def positionwise_ffn(x, w1, b1, w2, b2, gamma, beta, *,
                     tm=1024, tf=2048, allow_resident=True):
    """x: (B, L, d_model) -> (B, L, d_model).

    w1: (d_model, d_ff), w2: (d_ff, d_model)  (transpose of nn.Linear layout).
    Weights may be bf16; biases / LN params are used in f32.
    """
    B, L, d_model = x.shape
    d_ff = w1.shape[1]
    rows = B * L

    # Zero-pad d_ff to a lane multiple: zero W1 columns / zero W2 rows / zero b1
    # entries contribute exactly 0 to the output.
    d_ff_p = _round_up(d_ff, 128)
    if d_ff_p != d_ff:
        w1 = jnp.pad(w1, ((0, 0), (0, d_ff_p - d_ff)))
        w2 = jnp.pad(w2, ((0, d_ff_p - d_ff), (0, 0)))
        b1 = jnp.pad(b1, (0, d_ff_p - d_ff))

    x2d = x.reshape(rows, d_model)
    b1_ = b1.reshape(1, d_ff_p).astype(jnp.float32)
    b2_ = b2.reshape(1, d_model).astype(jnp.float32)
    gamma_ = gamma.reshape(1, d_model).astype(jnp.float32)
    beta_ = beta.reshape(1, d_model).astype(jnp.float32)

    x_bytes = x2d.dtype.itemsize
    w_bytes = w1.dtype.itemsize
    xn_bytes = w1.dtype.itemsize

    # Generation-aware budgets: 64 MiB (v7x) vs 128 MiB (v5e/v6e).
    vmem_cap = _vmem_capacity_bytes()
    plan_budget = (vmem_cap * 7) // 10          # headroom for compiler temps
    vmem_limit = (vmem_cap * 17) // 20

    def _finalize_tm(tm_sel):
        rows_p = _round_up(rows, tm_sel)
        # >= 2 row tiles whenever possible so both v7x TensorCores get work on
        # the "parallel" axis (harmless on single-TC v5e/v6e).
        if rows_p // tm_sel < 2 and tm_sel > 8:
            tm_sel = max(8, _round_up((rows + 1) // 2, 8))
            rows_p = _round_up(rows, tm_sel)
        return tm_sel, rows_p

    def _call(tm_sel, tf_sel, resident, weight_mode):
        tm_sel, rows_p = _finalize_tm(tm_sel)
        n_row_tiles = rows_p // tm_sel
        xp = x2d if rows_p == rows else jnp.pad(x2d, ((0, rows_p - rows), (0, 0)))

        # Weight traffic is multiplied by the number of row tiles only when the
        # weights are streamed; resident weights are fetched once per call.
        weight_passes = 1 if resident else n_row_tiles
        cost = pl.CostEstimate(
            flops=2 * 2 * rows_p * d_model * d_ff_p,        # two matmuls
            transcendentals=rows_p,                          # one rsqrt per row
            bytes_accessed=(
                rows_p * d_model * x_bytes                   # activation read
                + rows_p * d_model * x.dtype.itemsize        # output write
                + weight_passes * 2 * d_model * d_ff_p * w_bytes
                + 4 * (b1_.size + b2_.size + gamma_.size + beta_.size)),
        )
        params = pltpu.CompilerParams(
            dimension_semantics=(("parallel",) if resident
                                 else ("parallel", "arbitrary")),
            vmem_limit_bytes=int(vmem_limit),
        )
        out_shape = jax.ShapeDtypeStruct((rows_p, d_model), x.dtype)

        if resident:
            def _wspec(shape):
                if weight_mode is None:
                    return pl.BlockSpec(shape, lambda i: (0, 0))
                # Constant block index -> DMA'd once; single-buffer it so the
                # one-shot copy does not double its VMEM footprint.
                return pl.BlockSpec(shape, lambda i: (0, 0),
                                    pipeline_mode=weight_mode)

            out2d = pl.pallas_call(
                ffn_kernel_fused,
                out_shape=out_shape,
                grid_spec=pltpu.PrefetchScalarGridSpec(
                    num_scalar_prefetch=0,
                    grid=(n_row_tiles,),
                    in_specs=[
                        pl.BlockSpec((tm_sel, d_model), lambda i: (i, 0)),   # x rows
                        _wspec((d_model, d_ff_p)),                            # W1
                        pl.BlockSpec((1, d_ff_p), lambda i: (0, 0)),          # b1
                        _wspec((d_ff_p, d_model)),                            # W2
                        pl.BlockSpec((1, d_model), lambda i: (0, 0)),         # b2
                        pl.BlockSpec((1, d_model), lambda i: (0, 0)),         # gamma
                        pl.BlockSpec((1, d_model), lambda i: (0, 0)),         # beta
                    ],
                    out_specs=pl.BlockSpec((tm_sel, d_model), lambda i: (i, 0)),
                ),
                compiler_params=params,
                cost_estimate=cost,
            )(xp, w1, b1_, w2, b2_, gamma_, beta_)
        else:
            nf = d_ff_p // tf_sel
            # (A deeper pl.Buffered(3) prefetch on the weight slabs is an option
            # on v5e/v6e if the slab DMA is still exposed at these tile sizes.)
            out2d = pl.pallas_call(
                ffn_kernel_stream,
                out_shape=out_shape,
                grid_spec=pltpu.PrefetchScalarGridSpec(
                    num_scalar_prefetch=0,
                    grid=(n_row_tiles, nf),
                    in_specs=[
                        pl.BlockSpec((tm_sel, d_model), lambda i, j: (i, 0)),  # x rows
                        pl.BlockSpec((d_model, tf_sel), lambda i, j: (0, j)),  # W1 slab
                        pl.BlockSpec((1, tf_sel), lambda i, j: (0, j)),        # b1 slab
                        pl.BlockSpec((tf_sel, d_model), lambda i, j: (j, 0)),  # W2 slab
                        pl.BlockSpec((1, d_model), lambda i, j: (0, 0)),       # b2
                        pl.BlockSpec((1, d_model), lambda i, j: (0, 0)),       # gamma
                        pl.BlockSpec((1, d_model), lambda i, j: (0, 0)),       # beta
                    ],
                    out_specs=pl.BlockSpec((tm_sel, d_model), lambda i, j: (i, 0)),
                    scratch_shapes=[
                        pltpu.VMEM((tm_sel, d_model), w1.dtype),      # cached LN output
                        pltpu.VMEM((tm_sel, d_model), jnp.float32),   # 2nd-matmul accumulator
                    ],
                ),
                compiler_params=params,
                cost_estimate=cost,
            )(xp, w1, b1_, w2, b2_, gamma_, beta_)

        return out2d[:rows].reshape(B, L, d_model)

    # Plan assuming single-buffered resident weights first.
    tm1, tf1, resident1 = _select_config(
        rows, d_model, d_ff_p, x_bytes, w_bytes, xn_bytes,
        tm, tf, plan_budget, allow_resident, weight_bufs=1)

    if resident1:
        try:
            return _call(tm1, tf1, True, pl.Buffered(1))
        except Exception:
            # pipeline_mode=pl.Buffered(1) unavailable on this jax/Mosaic build:
            # re-plan with double-buffered weights (may fall back to streaming).
            tm2, tf2, resident2 = _select_config(
                rows, d_model, d_ff_p, x_bytes, w_bytes, xn_bytes,
                tm, tf, plan_budget, allow_resident, weight_bufs=2)
            return _call(tm2, tf2, resident2, None)
    return _call(tm1, tf1, False, None)


# ----------------------------------------------------------------------------
# Reference + demo
# ----------------------------------------------------------------------------
def reference_ffn(x, w1, b1, w2, b2, gamma, beta):
    """Pure-JAX reference with the same (bf16-MXU / f32-stats) numerics."""
    xf = x.astype(jnp.float32)
    mean = jnp.mean(xf, axis=-1, keepdims=True)
    var = jnp.mean((xf - mean) ** 2, axis=-1, keepdims=True)
    xn = (xf - mean) * jax.lax.rsqrt(var + LN_EPS) * gamma + beta
    h = jnp.dot(xn.astype(w1.dtype), w1, preferred_element_type=jnp.float32) + b1
    h = jnp.maximum(h, 0.0)
    y = jnp.dot(h.astype(w2.dtype), w2, preferred_element_type=jnp.float32) + b2
    return (y + xf).astype(x.dtype)


if __name__ == "__main__":
    # Small shapes consistent with the module: (batch, seq_len, d_model), d_ff hidden.
    B, L, d_model, d_ff = 2, 8, 128, 256

    key = jax.random.PRNGKey(0)
    kx, kw1, kb1, kw2, kb2 = jax.random.split(key, 5)

    x = jax.random.normal(kx, (B, L, d_model), dtype=jnp.float32)

    # PyTorch-Linear-style uniform init; weights stored bf16 (MXU-native),
    # biases / LN params in f32.
    bound1 = 1.0 / (d_model ** 0.5)
    bound2 = 1.0 / (d_ff ** 0.5)
    w1 = jax.random.uniform(kw1, (d_model, d_ff), jnp.float32,
                            -bound1, bound1).astype(jnp.bfloat16)
    b1 = jax.random.uniform(kb1, (d_ff,), jnp.float32, -bound1, bound1)
    w2 = jax.random.uniform(kw2, (d_ff, d_model), jnp.float32,
                            -bound2, bound2).astype(jnp.bfloat16)
    b2 = jax.random.uniform(kb2, (d_model,), jnp.float32, -bound2, bound2)
    gamma = jnp.ones((d_model,), jnp.float32)   # LayerNorm default weight
    beta = jnp.zeros((d_model,), jnp.float32)   # LayerNorm default bias

    # TODO(synk): dropout_1 / dropout_2 are identity (eval mode); training-mode
    # dropout would need pltpu.prng_seed + pltpu.prng_random_bits inside the kernel.

    ref = reference_ffn(x, w1, b1, w2, b2, gamma, beta)

    # Auto config: weights are tiny -> fused kernel with VMEM-resident weights,
    # 1-D row grid (>= 2 row tiles for megacore).
    out = jax.block_until_ready(positionwise_ffn(x, w1, b1, w2, b2, gamma, beta))
    assert out.shape == (B, L, d_model)
    assert jnp.allclose(out, ref, atol=2e-3, rtol=2e-3), "fused/resident mismatch"

    # Force the streaming configuration (d_ff reduction axis, nf=2) so the
    # accumulator path is exercised as well.
    out_s = jax.block_until_ready(
        positionwise_ffn(x, w1, b1, w2, b2, gamma, beta,
                         allow_resident=False, tf=128))
    assert out_s.shape == (B, L, d_model)
    assert jnp.allclose(out_s, ref, atol=2e-3, rtol=2e-3), "streaming mismatch"

    print("KERNEL_OK")
</pallas_src>

<mosaic_0001>
module attributes {stable_mosaic.version = 11 : i64} {
  func.func @ffn_kernel_fused(%arg0: i32, %arg1: memref<8x128xf32, #tpu.memory_space<vmem>>, %arg2: memref<128x256xbf16, #tpu.memory_space<vmem>>, %arg3: memref<1x256xf32, #tpu.memory_space<vmem>>, %arg4: memref<256x128xbf16, #tpu.memory_space<vmem>>, %arg5: memref<1x128xf32, #tpu.memory_space<vmem>>, %arg6: memref<1x128xf32, #tpu.memory_space<vmem>>, %arg7: memref<1x128xf32, #tpu.memory_space<vmem>>, %arg8: memref<8x128xf32, #tpu.memory_space<vmem>>) attributes {dimension_semantics = [#tpu.dimension_semantics<parallel>], iteration_bounds = array<i64: 2>, scalar_prefetch = 0 : i64, scratch_operands = 0 : i64, tpu.core_type = #tpu.core_type<tc>, window_params = [{transform_indices = @transform_0, window_bounds = array<i64: 8, 128>}, {pipeline_mode = #tpu.pipeline_mode<synchronous>, transform_indices = @transform_1, window_bounds = array<i64: 128, 256>}, {pipeline_mode = #tpu.pipeline_mode<synchronous>, transform_indices = @transform_2, window_bounds = array<i64: 1, 256>}, {pipeline_mode = #tpu.pipeline_mode<synchronous>, transform_indices = @transform_3, window_bounds = array<i64: 256, 128>}, {pipeline_mode = #tpu.pipeline_mode<synchronous>, transform_indices = @transform_4, window_bounds = array<i64: 1, 128>}, {pipeline_mode = #tpu.pipeline_mode<synchronous>, transform_indices = @transform_5, window_bounds = array<i64: 1, 128>}, {pipeline_mode = #tpu.pipeline_mode<synchronous>, transform_indices = @transform_6, window_bounds = array<i64: 1, 128>}, {transform_indices = @transform_7, window_bounds = array<i64: 8, 128>}]} {
    %c0 = arith.constant 0 : index
    %c0_0 = arith.constant 0 : index
    %0 = vector.load %arg1[%c0, %c0_0] : memref<8x128xf32, #tpu.memory_space<vmem>>, vector<8x128xf32>
    %cst = arith.constant dense<0.000000e+00> : vector<8xf32>
    %1 = vector.multi_reduction <add>, %0, %cst [1] : vector<8x128xf32> to vector<8xf32>
    %2 = vector.shape_cast %1 : vector<8xf32> to vector<8x1xf32>
    %cst_1 = arith.constant 1.280000e+02 : f32
    %3 = vector.broadcast %cst_1 : f32 to vector<8x1xf32>
    %4 = arith.divf %2, %3 : vector<8x1xf32>
    %5 = vector.broadcast %4 : vector<8x1xf32> to vector<8x128xf32>
    %6 = arith.subf %0, %5 : vector<8x128xf32>
    %7 = arith.mulf %6, %6 : vector<8x128xf32>
    %cst_2 = arith.constant dense<0.000000e+00> : vector<8xf32>
    %8 = vector.multi_reduction <add>, %7, %cst_2 [1] : vector<8x128xf32> to vector<8xf32>
    %9 = vector.shape_cast %8 : vector<8xf32> to vector<8x1xf32>
    %cst_3 = arith.constant 1.280000e+02 : f32
    %10 = vector.broadcast %cst_3 : f32 to vector<8x1xf32>
    %11 = arith.divf %9, %10 : vector<8x1xf32>
    %cst_4 = arith.constant 9.99999997E-7 : f32
    %12 = vector.broadcast %cst_4 : f32 to vector<8x1xf32>
    %13 = arith.addf %11, %12 : vector<8x1xf32>
    %14 = math.rsqrt %13 : vector<8x1xf32>
    %15 = vector.broadcast %14 : vector<8x1xf32> to vector<8x128xf32>
    %16 = arith.mulf %6, %15 : vector<8x128xf32>
    %c0_5 = arith.constant 0 : index
    %c0_6 = arith.constant 0 : index
    %17 = vector.load %arg6[%c0_5, %c0_6] : memref<1x128xf32, #tpu.memory_space<vmem>>, vector<1x128xf32>
    %18 = vector.broadcast %17 : vector<1x128xf32> to vector<8x128xf32>
    %19 = arith.mulf %16, %18 : vector<8x128xf32>
    %c0_7 = arith.constant 0 : index
    %c0_8 = arith.constant 0 : index
    %20 = vector.load %arg7[%c0_7, %c0_8] : memref<1x128xf32, #tpu.memory_space<vmem>>, vector<1x128xf32>
    %21 = vector.broadcast %20 : vector<1x128xf32> to vector<8x128xf32>
    %22 = arith.addf %19, %21 : vector<8x128xf32>
    %23 = arith.truncf %22 : vector<8x128xf32> to vector<8x128xbf16>
    %c0_9 = arith.constant 0 : index
    %c0_10 = arith.constant 0 : index
    %24 = vector.load %arg2[%c0_9, %c0_10] : memref<128x256xbf16, #tpu.memory_space<vmem>>, vector<128x256xbf16>
    %cst_11 = arith.constant dense<0.000000e+00> : vector<8x256xf32>
    %25 = tpu.matmul %23, %24, %cst_11 {dimension_numbers = #tpu.dot_dimension_numbers<[1], [0], [0], [1], [0, 0, 1, 1], [], []>} : vector<8x128xbf16>, vector<128x256xbf16>, vector<8x256xf32> -> vector<8x256xf32>
    %c0_12 = arith.constant 0 : index
    %c0_13 = arith.constant 0 : index
    %26 = vector.load %arg3[%c0_12, %c0_13] : memref<1x256xf32, #tpu.memory_space<vmem>>, vector<1x256xf32>
    %27 = vector.broadcast %26 : vector<1x256xf32> to vector<8x256xf32>
    %28 = arith.addf %25, %27 : vector<8x256xf32>
    %cst_14 = arith.constant 0.000000e+00 : f32
    %29 = vector.broadcast %cst_14 : f32 to vector<8x256xf32>
    %30 = arith.maximumf %28, %29 : vector<8x256xf32>
    %31 = arith.truncf %30 : vector<8x256xf32> to vector<8x256xbf16>
    %c0_15 = arith.constant 0 : index
    %c0_16 = arith.constant 0 : index
    %32 = vector.load %arg4[%c0_15, %c0_16] : memref<256x128xbf16, #tpu.memory_space<vmem>>, vector<256x128xbf16>
    %cst_17 = arith.constant dense<0.000000e+00> : vector<8x128xf32>
    %33 = tpu.matmul %31, %32, %cst_17 {dimension_numbers = #tpu.dot_dimension_numbers<[1], [0], [0], [1], [0, 0, 1, 1], [], []>} : vector<8x256xbf16>, vector<256x128xbf16>, vector<8x128xf32> -> vector<8x128xf32>
    %c0_18 = arith.constant 0 : index
    %c0_19 = arith.constant 0 : index
    %34 = vector.load %arg5[%c0_18, %c0_19] : memref<1x128xf32, #tpu.memory_space<vmem>>, vector<1x128xf32>
    %35 = vector.broadcast %34 : vector<1x128xf32> to vector<8x128xf32>
    %36 = arith.addf %33, %35 : vector<8x128xf32>
    %37 = arith.addf %36, %0 : vector<8x128xf32>
    %c0_20 = arith.constant 0 : index
    %c0_21 = arith.constant 0 : index
    %38 = vector.load %arg8[%c0_20, %c0_21] : memref<8x128xf32, #tpu.memory_space<vmem>>, vector<8x128xf32>
    tpu.vector_store %arg8[%c0_20, %c0_21], %37 {strides = array<i32>} : memref<8x128xf32, #tpu.memory_space<vmem>>, vector<8x128xf32>,
    return
  }
  func.func @transform_0(%arg0: i32) -> (i32, i32) {
    %c0_i32 = arith.constant 0 : i32
    %c0_i32_0 = arith.constant 0 : i32
    return %arg0, %c0_i32 : i32, i32
  }
  func.func @transform_1(%arg0: i32) -> (i32, i32) {
    %c0_i32 = arith.constant 0 : i32
    %c0_i32_0 = arith.constant 0 : i32
    %c0_i32_1 = arith.constant 0 : i32
    return %c0_i32, %c0_i32_0 : i32, i32
  }
  func.func @transform_2(%arg0: i32) -> (i32, i32) {
    %c0_i32 = arith.constant 0 : i32
    %c0_i32_0 = arith.constant 0 : i32
    %c0_i32_1 = arith.constant 0 : i32
    return %c0_i32, %c0_i32_0 : i32, i32
  }
  func.func @transform_3(%arg0: i32) -> (i32, i32) {
    %c0_i32 = arith.constant 0 : i32
    %c0_i32_0 = arith.constant 0 : i32
    %c0_i32_1 = arith.constant 0 : i32
    return %c0_i32, %c0_i32_0 : i32, i32
  }
  func.func @transform_4(%arg0: i32) -> (i32, i32) {
    %c0_i32 = arith.constant 0 : i32
    %c0_i32_0 = arith.constant 0 : i32
    %c0_i32_1 = arith.constant 0 : i32
    return %c0_i32, %c0_i32_0 : i32, i32
  }
  func.func @transform_5(%arg0: i32) -> (i32, i32) {
    %c0_i32 = arith.constant 0 : i32
    %c0_i32_0 = arith.constant 0 : i32
    %c0_i32_1 = arith.constant 0 : i32
    return %c0_i32, %c0_i32_0 : i32, i32
  }
  func.func @transform_6(%arg0: i32) -> (i32, i32) {
    %c0_i32 = arith.constant 0 : i32
    %c0_i32_0 = arith.constant 0 : i32
    %c0_i32_1 = arith.constant 0 : i32
    return %c0_i32, %c0_i32_0 : i32, i32
  }
  func.func @transform_7(%arg0: i32) -> (i32, i32) {
    %c0_i32 = arith.constant 0 : i32
    %c0_i32_0 = arith.constant 0 : i32
    return %arg0, %c0_i32 : i32, i32
  }
}

module attributes {stable_mosaic.version = 11 : i64} {
  func.func @ffn_kernel_fused(%arg0: i32, %arg1: memref<8x128xf32, #tpu.memory_space<vmem>>, %arg2: memref<128x256xbf16, #tpu.memory_space<vmem>>, %arg3: memref<1x256xf32, #tpu.memory_space<vmem>>, %arg4: memref<256x128xbf16, #tpu.memory_space<vmem>>, %arg5: memref<1x128xf32, #tpu.memory_space<vmem>>, %arg6: memref<1x128xf32, #tpu.memory_space<vmem>>, %arg7: memref<1x128xf32, #tpu.memory_space<vmem>>, %arg8: memref<8x128xf32, #tpu.memory_space<vmem>>) attributes {dimension_semantics = [#tpu.dimension_semantics<parallel>], iteration_bounds = array<i64: 2>, scalar_prefetch = 0 : i64, scratch_operands = 0 : i64, tpu.core_type = #tpu.core_type<tc>, window_params = [{transform_indices = @transform_0, window_bounds = array<i64: 8, 128>}, {pipeline_mode = #tpu.pipeline_mode<synchronous>, transform_indices = @transform_1, window_bounds = array<i64: 128, 256>}, {pipeline_mode = #tpu.pipeline_mode<synchronous>, transform_indices = @transform_2, window_bounds = array<i64: 1, 256>}, {pipeline_mode = #tpu.pipeline_mode<synchronous>, transform_indices = @transform_3, window_bounds = array<i64: 256, 128>}, {pipeline_mode = #tpu.pipeline_mode<synchronous>, transform_indices = @transform_4, window_bounds = array<i64: 1, 128>}, {pipeline_mode = #tpu.pipeline_mode<synchronous>, transform_indices = @transform_5, window_bounds = array<i64: 1, 128>}, {pipeline_mode = #tpu.pipeline_mode<synchronous>, transform_indices = @transform_6, window_bounds = array<i64: 1, 128>}, {transform_indices = @transform_7, window_bounds = array<i64: 8, 128>}]} {
    %c0 = arith.constant 0 : index
    %c0_0 = arith.constant 0 : index
    %0 = vector.load %arg1[%c0, %c0_0] : memref<8x128xf32, #tpu.memory_space<vmem>>, vector<8x128xf32>
    %cst = arith.constant dense<0.000000e+00> : vector<8xf32>
    %1 = vector.multi_reduction <add>, %0, %cst [1] : vector<8x128xf32> to vector<8xf32>
    %2 = vector.shape_cast %1 : vector<8xf32> to vector<8x1xf32>
    %cst_1 = arith.constant 1.280000e+02 : f32
    %3 = vector.broadcast %cst_1 : f32 to vector<8x1xf32>
    %4 = arith.divf %2, %3 : vector<8x1xf32>
    %5 = vector.broadcast %4 : vector<8x1xf32> to vector<8x128xf32>
    %6 = arith.subf %0, %5 : vector<8x128xf32>
    %7 = arith.mulf %6, %6 : vector<8x128xf32>
    %cst_2 = arith.constant dense<0.000000e+00> : vector<8xf32>
    %8 = vector.multi_reduction <add>, %7, %cst_2 [1] : vector<8x128xf32> to vector<8xf32>
    %9 = vector.shape_cast %8 : vector<8xf32> to vector<8x1xf32>
    %cst_3 = arith.constant 1.280000e+02 : f32
    %10 = vector.broadcast %cst_3 : f32 to vector<8x1xf32>
    %11 = arith.divf %9, %10 : vector<8x1xf32>
    %cst_4 = arith.constant 9.99999997E-7 : f32
    %12 = vector.broadcast %cst_4 : f32 to vector<8x1xf32>
    %13 = arith.addf %11, %12 : vector<8x1xf32>
    %14 = math.rsqrt %13 : vector<8x1xf32>
    %15 = vector.broadcast %14 : vector<8x1xf32> to vector<8x128xf32>
    %16 = arith.mulf %6, %15 : vector<8x128xf32>
    %c0_5 = arith.constant 0 : index
    %c0_6 = arith.constant 0 : index
    %17 = vector.load %arg6[%c0_5, %c0_6] : memref<1x128xf32, #tpu.memory_space<vmem>>, vector<1x128xf32>
    %18 = vector.broadcast %17 : vector<1x128xf32> to vector<8x128xf32>
    %19 = arith.mulf %16, %18 : vector<8x128xf32>
    %c0_7 = arith.constant 0 : index
    %c0_8 = arith.constant 0 : index
    %20 = vector.load %arg7[%c0_7, %c0_8] : memref<1x128xf32, #tpu.memory_space<vmem>>, vector<1x128xf32>
    %21 = vector.broadcast %20 : vector<1x128xf32> to vector<8x128xf32>
    %22 = arith.addf %19, %21 : vector<8x128xf32>
    %23 = arith.truncf %22 : vector<8x128xf32> to vector<8x128xbf16>
    %c0_9 = arith.constant 0 : index
    %c0_10 = arith.constant 0 : index
    %24 = vector.load %arg2[%c0_9, %c0_10] : memref<128x256xbf16, #tpu.memory_space<vmem>>, vector<128x256xbf16>
    %cst_11 = arith.constant dense<0.000000e+00> : vector<8x256xf32>
    %25 = tpu.matmul %23, %24, %cst_11 {dimension_numbers = #tpu.dot_dimension_numbers<[1], [0], [0], [1], [0, 0, 1, 1], [], []>} : vector<8x128xbf16>, vector<128x256xbf16>, vector<8x256xf32> -> vector<8x256xf32>
    %c0_12 = arith.constant 0 : index
    %c0_13 = arith.constant 0 : index
    %26 = vector.load %arg3[%c0_12, %c0_13] : memref<1x256xf32, #tpu.memory_space<vmem>>, vector<1x256xf32>
    %27 = vector.broadcast %26 : vector<1x256xf32> to vector<8x256xf32>
    %28 = arith.addf %25, %27 : vector<8x256xf32>
    %cst_14 = arith.constant 0.000000e+00 : f32
    %29 = vector.broadcast %cst_14 : f32 to vector<8x256xf32>
    %30 = arith.maximumf %28, %29 : vector<8x256xf32>
    %31 = arith.truncf %30 : vector<8x256xf32> to vector<8x256xbf16>
    %c0_15 = arith.constant 0 : index
    %c0_16 = arith.constant 0 : index
    %32 = vector.load %arg4[%c0_15, %c0_16] : memref<256x128xbf16, #tpu.memory_space<vmem>>, vector<256x128xbf16>
    %cst_17 = arith.constant dense<0.000000e+00> : vector<8x128xf32>
    %33 = tpu.matmul %31, %32, %cst_17 {dimension_numbers = #tpu.dot_dimension_numbers<[1], [0], [0], [1], [0, 0, 1, 1], [], []>} : vector<8x256xbf16>, vector<256x128xbf16>, vector<8x128xf32> -> vector<8x128xf32>
    %c0_18 = arith.constant 0 : index
    %c0_19 = arith.constant 0 : index
    %34 = vector.load %arg5[%c0_18, %c0_19] : memref<1x128xf32, #tpu.memory_space<vmem>>, vector<1x128xf32>
    %35 = vector.broadcast %34 : vector<1x128xf32> to vector<8x128xf32>
    %36 = arith.addf %33, %35 : vector<8x128xf32>
    %37 = arith.addf %36, %0 : vector<8x128xf32>
    %c0_20 = arith.constant 0 : index
    %c0_21 = arith.constant 0 : index
    %38 = vector.load %arg8[%c0_20, %c0_21] : memref<8x128xf32, #tpu.memory_space<vmem>>, vector<8x128xf32>
    tpu.vector_store %arg8[%c0_20, %c0_21], %37 {strides = array<i32>} : memref<8x128xf32, #tpu.memory_space<vmem>>, vector<8x128xf32>,
    return
  }
  func.func @transform_0(%arg0: i32) -> (i32, i32) {
    %c0_i32 = arith.constant 0 : i32
    %c0_i32_0 = arith.constant 0 : i32
    return %arg0, %c0_i32 : i32, i32
  }
  func.func @transform_1(%arg0: i32) -> (i32, i32) {
    %c0_i32 = arith.constant 0 : i32
    %c0_i32_0 = arith.constant 0 : i32
    %c0_i32_1 = arith.constant 0 : i32
    return %c0_i32, %c0_i32_0 : i32, i32
  }
  func.func @transform_2(%arg0: i32) -> (i32, i32) {
    %c0_i32 = arith.constant 0 : i32
    %c0_i32_0 = arith.constant 0 : i32
    %c0_i32_1 = arith.constant 0 : i32
    return %c0_i32, %c0_i32_0 : i32, i32
  }
  func.func @transform_3(%arg0: i32) -> (i32, i32) {
    %c0_i32 = arith.constant 0 : i32
    %c0_i32_0 = arith.constant 0 : i32
    %c0_i32_1 = arith.constant 0 : i32
    return %c0_i32, %c0_i32_0 : i32, i32
  }
  func.func @transform_4(%arg0: i32) -> (i32, i32) {
    %c0_i32 = arith.constant 0 : i32
    %c0_i32_0 = arith.constant 0 : i32
    %c0_i32_1 = arith.constant 0 : i32
    return %c0_i32, %c0_i32_0 : i32, i32
  }
  func.func @transform_5(%arg0: i32) -> (i32, i32) {
    %c0_i32 = arith.constant 0 : i32
    %c0_i32_0 = arith.constant 0 : i32
    %c0_i32_1 = arith.constant 0 : i32
    return %c0_i32, %c0_i32_0 : i32, i32
  }
  func.func @transform_6(%arg0: i32) -> (i32, i32) {
    %c0_i32 = arith.constant 0 : i32
    %c0_i32_0 = arith.constant 0 : i32
    %c0_i32_1 = arith.constant 0 : i32
    return %c0_i32, %c0_i32_0 : i32, i32
  }
  func.func @transform_7(%arg0: i32) -> (i32, i32) {
    %c0_i32 = arith.constant 0 : i32
    %c0_i32_0 = arith.constant 0 : i32
    return %arg0, %c0_i32 : i32, i32
  }
}

</mosaic_0001>

<llo_original>
// kernel: tpu_custom_call.1
$region0: #{tpu_custom_call.1}
  #allocation0 [shape = 'u32[]', space=smem, size = 0x4, offset = 0x4, fixed_abs, tag = 'smem constant byte address 0x4 - core index']
  #allocation1 [shape = 'u32[144,128]{1,0:T(1,128)}', space=vmem, size = 0x12000, scoped, tag = 'internal scratch']
  %s0 = inlined_call_operand.hbm [shape: f32[16,128], index: 0, kind: input, shape index: {}]
  %s1 = inlined_call_operand.hbm [shape: bf16[128,256], index: 1, kind: input, shape index: {}]
  %s2 = inlined_call_operand.vmem [shape: f32[1,256], index: 2, kind: input, shape index: {}]
  %s3 = inlined_call_operand.hbm [shape: bf16[256,128], index: 3, kind: input, shape index: {}]
  %s4 = inlined_call_operand.vmem [shape: f32[1,128], index: 4, kind: input, shape index: {}]
  %s5 = inlined_call_operand.vmem [shape: f32[1,128], index: 5, kind: input, shape index: {}]
  %s6 = inlined_call_operand.vmem [shape: f32[1,128], index: 6, kind: input, shape index: {}]
  %s7 = inlined_call_operand.hbm [shape: f32[16,128], index: 7, kind: output, shape index: {}]
  %s8 = sld [smem:[#allocation0]]
  $region73: #{tpu_custom_call.1} parent=0
    _
  %s10 = ssub.s32 1, %s8
  %s11 = scalar_select 0, %s10, %s8
  $region1: #{tpu_custom_call.1} parent=0
    #allocation2 [shape = 'u8[8192]{0}', space=vmem, size = 0x2000, scoped, tag = 'input window, operand 0']
    #allocation3 [shape = 's32[2]{0}', space=sflag, size = 0x8, scoped, tag = 'scoped memory for tpu_custom_call.1']
    #allocation4 [shape = 's32[2]{0}', space=sflag, size = 0x8, scoped, tag = 'scoped memory for tpu_custom_call.1']
    #allocation5 [shape = 'u8[65536]{0}', space=vmem, size = 0x10000, scoped, tag = 'input window, operand 1, single buffered']
    #allocation6 [shape = 's32[1]{0}', space=sflag, size = 0x4, scoped, tag = 'scoped memory for tpu_custom_call.1']
    #allocation7 [shape = 'u8[65536]{0}', space=vmem, size = 0x10000, scoped, tag = 'input window, operand 3, single buffered']
    #allocation8 [shape = 'u8[8192]{0}', space=vmem, size = 0x2000, scoped, tag = 'output window, operand 0']
    %12 = vsyncpa [#allocation3], 0
    %s13 = scalar_lea.sflag [#allocation3], 1
    %14 = vsyncpa %s13, 0
    %15 = vsyncpa [#allocation6], 0
    %16 = vsyncpa [#allocation4], 0
    %s17 = scalar_lea.sflag [#allocation4], 1
    %18 = vsyncpa %s17, 0
    loop: start=0, step=1, limit=4
    $region2: #{tpu_custom_call.1} parent=1 // loop_pre_header
      _
    $region3: #{tpu_custom_call.1} parent=1 // loop_header
      %s20 = sphi 0, %s24
      %p21 = scmp.ge.s32.totalorder %s20, 4
      %s30 = sphi 0, %s32
      %s33 = sphi 0, %s30
      %s34 = sphi 0, %s33
      %s50 = sphi 0, %s34
      %s54 = sphi 0, %s54
      %s56 = sphi 0, %s54
      %s57 = sphi 0, %s56
      %s71 = sphi 0, %s57
      %s75 = sphi 0, %s75
      %s77 = sphi 0, %s75
      %s78 = sphi 0, %s77
      %s92 = sphi 0, %s78
      %s96 = sphi 0, %s96
      %s98 = sphi 0, %s96
      %s99 = sphi 0, %s98
      %s113 = sphi 0, %s99
      %s117 = sphi 0, %s117
      %s119 = sphi 0, %s117
      %s120 = sphi 0, %s119
      %s134 = sphi 0, %s120
      %s138 = sphi 0, %s138
      %s140 = sphi 0, %s138
      %s141 = sphi 0, %s140
      %s155 = sphi 0, %s141
      %s159 = sphi 0, %s159
      %s161 = sphi 0, %s159
      %s162 = sphi 0, %s161
      %s176 = sphi 0, %s162
      %s182 = sphi 0, %s184
      %s185 = sphi 0, %s182
      %s186 = sphi 0, %s185
      %s202 = sphi 0, %s186
    $region4: #{tpu_custom_call.1} parent=1 // loop_header_branch
      %23 = sbr.rel (%p21) target = $region8
    $region5: #{tpu_custom_call.1} parent=1 // loop_body
      %s25 = ssub.s32 %s20, 1
      %s26 = ssub.s32 %s20, 2
      %s27 = sadd.s32 %s20, 1
      %s28 = ssub.s32 %s20, %s27
      %p29 = scmp.eq.s32.totalorder %s28, 0
      %s31 = sadd.s32 %s30, 1
      %s32 = scalar_select %p29, %s30, %s31
      %p35 = pneg %p29
      %p36 = scmp.eq.s32.totalorder %s20, 1
      %p37 = por %p35, %p36
      %p38 = scmp.ne.s32.totalorder %s30, %s33
      %p39 = scmp.eq.s32.totalorder %s20, 0
      %p40 = por %p38, %p39
      %p41 = scmp.ne.s32.totalorder %s30, %s33
      %p42 = scmp.eq.s32.totalorder %s25, 1
      %p43 = por %p41, %p42
      %p44 = scmp.ne.s32.totalorder %s33, %s34
      %p45 = scmp.eq.s32.totalorder %s25, 0
      %p46 = por %p44, %p45
      %p47 = scmp.ne.s32.totalorder %s33, %s34
      %p48 = scmp.eq.s32.totalorder %s26, 1
      %p49 = por %p47, %p48
      %p51 = scmp.ne.s32.totalorder %s34, %s50
      %p52 = scmp.eq.s32.totalorder %s26, 0
      %p53 = por %p51, %p52
      %s55 = sadd.s32 %s54, 1
      %p58 = scmp.eq.s32.totalorder %s20, 1
      %p59 = scmp.ne.s32.totalorder %s54, %s56
      %p60 = scmp.eq.s32.totalorder %s20, 0
      %p61 = por %p59, %p60
      %p62 = scmp.ne.s32.totalorder %s54, %s56
      %p63 = scmp.eq.s32.totalorder %s25, 1
      %p64 = por %p62, %p63
      %p65 = scmp.ne.s32.totalorder %s56, %s57
      %p66 = scmp.eq.s32.totalorder %s25, 0
      %p67 = por %p65, %p66
      %p68 = scmp.ne.s32.totalorder %s56, %s57
      %p69 = scmp.eq.s32.totalorder %s26, 1
      %p70 = por %p68, %p69
      %p72 = scmp.ne.s32.totalorder %s57, %s71
      %p73 = scmp.eq.s32.totalorder %s26, 0
      %p74 = por %p72, %p73
      %s76 = sadd.s32 %s75, 1
      %p79 = scmp.eq.s32.totalorder %s20, 1
      %p80 = scmp.ne.s32.totalorder %s75, %s77
      %p81 = scmp.eq.s32.totalorder %s20, 0
      %p82 = por %p80, %p81
      %p83 = scmp.ne.s32.totalorder %s75, %s77
      %p84 = scmp.eq.s32.totalorder %s25, 1
      %p85 = por %p83, %p84
      %p86 = scmp.ne.s32.totalorder %s77, %s78
      %p87 = scmp.eq.s32.totalorder %s25, 0
      %p88 = por %p86, %p87
      %p89 = scmp.ne.s32.totalorder %s77, %s78
      %p90 = scmp.eq.s32.totalorder %s26, 1
      %p91 = por %p89, %p90
      %p93 = scmp.ne.s32.totalorder %s78, %s92
      %p94 = scmp.eq.s32.totalorder %s26, 0
      %p95 = por %p93, %p94
      %s97 = sadd.s32 %s96, 1
      %p100 = scmp.eq.s32.totalorder %s20, 1
      %p101 = scmp.ne.s32.totalorder %s96, %s98
      %p102 = scmp.eq.s32.totalorder %s20, 0
      %p103 = por %p101, %p102
      %p104 = scmp.ne.s32.totalorder %s96, %s98
      %p105 = scmp.eq.s32.totalorder %s25, 1
      %p106 = por %p104, %p105
      %p107 = scmp.ne.s32.totalorder %s98, %s99
      %p108 = scmp.eq.s32.totalorder %s25, 0
      %p109 = por %p107, %p108
      %p110 = scmp.ne.s32.totalorder %s98, %s99
      %p111 = scmp.eq.s32.totalorder %s26, 1
      %p112 = por %p110, %p111
      %p114 = scmp.ne.s32.totalorder %s99, %s113
      %p115 = scmp.eq.s32.totalorder %s26, 0
      %p116 = por %p114, %p115
      %s118 = sadd.s32 %s117, 1
      %p121 = scmp.eq.s32.totalorder %s20, 1
      %p122 = scmp.ne.s32.totalorder %s117, %s119
      %p123 = scmp.eq.s32.totalorder %s20, 0
      %p124 = por %p122, %p123
      %p125 = scmp.ne.s32.totalorder %s117, %s119
      %p126 = scmp.eq.s32.totalorder %s25, 1
      %p127 = por %p125, %p126
      %p128 = scmp.ne.s32.totalorder %s119, %s120
      %p129 = scmp.eq.s32.totalorder %s25, 0
      %p130 = por %p128, %p129
      %p131 = scmp.ne.s32.totalorder %s119, %s120
      %p132 = scmp.eq.s32.totalorder %s26, 1
      %p133 = por %p131, %p132
      %p135 = scmp.ne.s32.totalorder %s120, %s134
      %p136 = scmp.eq.s32.totalorder %s26, 0
      %p137 = por %p135, %p136
      %s139 = sadd.s32 %s138, 1
      %p142 = scmp.eq.s32.totalorder %s20, 1
      %p143 = scmp.ne.s32.totalorder %s138, %s140
      %p144 = scmp.eq.s32.totalorder %s20, 0
      %p145 = por %p143, %p144
      %p146 = scmp.ne.s32.totalorder %s138, %s140
      %p147 = scmp.eq.s32.totalorder %s25, 1
      %p148 = por %p146, %p147
      %p149 = scmp.ne.s32.totalorder %s140, %s141
      %p150 = scmp.eq.s32.totalorder %s25, 0
      %p151 = por %p149, %p150
      %p152 = scmp.ne.s32.totalorder %s140, %s141
      %p153 = scmp.eq.s32.totalorder %s26, 1
      %p154 = por %p152, %p153
      %p156 = scmp.ne.s32.totalorder %s141, %s155
      %p157 = scmp.eq.s32.totalorder %s26, 0
      %p158 = por %p156, %p157
      %s160 = sadd.s32 %s159, 1
      %p163 = scmp.eq.s32.totalorder %s20, 1
      %p164 = scmp.ne.s32.totalorder %s159, %s161
      %p165 = scmp.eq.s32.totalorder %s20, 0
      %p166 = por %p164, %p165
      %p167 = scmp.ne.s32.totalorder %s159, %s161
      %p168 = scmp.eq.s32.totalorder %s25, 1
      %p169 = por %p167, %p168
      %p170 = scmp.ne.s32.totalorder %s161, %s162
      %p171 = scmp.eq.s32.totalorder %s25, 0
      %p172 = por %p170, %p171
      %p173 = scmp.ne.s32.totalorder %s161, %s162
      %p174 = scmp.eq.s32.totalorder %s26, 1
      %p175 = por %p173, %p174
      %p177 = scmp.ne.s32.totalorder %s162, %s176
      %p178 = scmp.eq.s32.totalorder %s26, 0
      %p179 = por %p177, %p178
      %s180 = ssub.s32 %s20, %s27
      %p181 = scmp.eq.s32.totalorder %s180, 0
      %s183 = sadd.s32 %s182, 1
      %s184 = scalar_select %p181, %s182, %s183
      %p187 = pneg %p181
      %p188 = scmp.eq.s32.totalorder %s20, 1
      %p189 = por %p187, %p188
      %p190 = scmp.ne.s32.totalorder %s182, %s185
      %p191 = scmp.eq.s32.totalorder %s20, 0
      %p192 = por %p190, %p191
      %p193 = scmp.ne.s32.totalorder %s182, %s185
      %p194 = scmp.eq.s32.totalorder %s25, 1
      %p195 = por %p193, %p194
      %p196 = scmp.ne.s32.totalorder %s185, %s186
      %p197 = scmp.eq.s32.totalorder %s25, 0
      %p198 = por %p196, %p197
      %p199 = scmp.ne.s32.totalorder %s185, %s186
      %p200 = scmp.eq.s32.totalorder %s26, 1
      %p201 = por %p199, %p200
      %p203 = scmp.ne.s32.totalorder %s186, %s202
      %p204 = scmp.eq.s32.totalorder %s26, 0
      %p205 = por %p203, %p204
      %p206 = scmp.le.s32.totalorder 1, %s20
      %p207 = scmp.lt.s32.totalorder %s20, 3
      %p208 = pnand %p206, %p207
      %p209 = pneg %p208
      // Predicated region
      $region9: #{tpu_custom_call.1} parent=5 // pred_check
        _
      $region10: #{tpu_custom_call.1} parent=5 // pred_check_branch
        %211 = sbr.rel (%p208) target = $region12
      $region11: #{tpu_custom_call.1} parent=5 // pred_region
        %s212 = ssub.s32 %s20, 1
        // Predicated region
        $region13: #{tpu_custom_call.1} parent=11 // pred_check
          %p213 = pneg %p67
        $region14: #{tpu_custom_call.1} parent=11 // pred_check_branch
          %215 = sbr.rel (%p213) target = $region16
        $region15: #{tpu_custom_call.1} parent=11 // pred_region
          %s217 = ssub.s32 2048, 2048
          %218 = vsyncadd [#allocation6], %s217
          %s219 = sshll.u32 [#allocation5], 4
          %s220 = int_to_ptr.vmem [resolvable:$true] %s219
          %225 = dma.hbm_to_vmem [thread:$0]  %s1, 2048, %s220, [#allocation6], 128, 128, 8
        $region16: #{tpu_custom_call.1} parent=11 // pred_fallthru
          _
        // Predicated region
        $region17: #{tpu_custom_call.1} parent=11 // pred_check
          %p226 = pneg %p88
        $region18: #{tpu_custom_call.1} parent=11 // pred_check_branch
          %228 = sbr.rel (%p226) target = $region20
        $region19: #{tpu_custom_call.1} parent=11 // pred_region
          _
        $region20: #{tpu_custom_call.1} parent=11 // pred_fallthru
          _
        // Predicated region
        $region21: #{tpu_custom_call.1} parent=11 // pred_check
          %p229 = pneg %p109
        $region22: #{tpu_custom_call.1} parent=11 // pred_check_branch
          %231 = sbr.rel (%p229) target = $region24
        $region23: #{tpu_custom_call.1} parent=11 // pred_region
          %s233 = ssub.s32 2048, 2048
          %234 = vsyncadd [#allocation6], %s233
          %s235 = sshll.u32 [#allocation7], 4
          %s236 = int_to_ptr.vmem [resolvable:$true] %s235
          %241 = dma.hbm_to_vmem [thread:$0]  %s3, 2048, %s236, [#allocation6], 64, 64, 4
        $region24: #{tpu_custom_call.1} parent=11 // pred_fallthru
          _
        // Predicated region
        $region25: #{tpu_custom_call.1} parent=11 // pred_check
          %p242 = pneg %p130
        $region26: #{tpu_custom_call.1} parent=11 // pred_check_branch
          %244 = sbr.rel (%p242) target = $region28
        $region27: #{tpu_custom_call.1} parent=11 // pred_region
          _
        $region28: #{tpu_custom_call.1} parent=11 // pred_fallthru
          _
        // Predicated region
        $region29: #{tpu_custom_call.1} parent=11 // pred_check
          %p245 = pneg %p151
        $region30: #{tpu_custom_call.1} parent=11 // pred_check_branch
          %247 = sbr.rel (%p245) target = $region32
        $region31: #{tpu_custom_call.1} parent=11 // pred_region
          _
        $region32: #{tpu_custom_call.1} parent=11 // pred_fallthru
          _
        // Predicated region
        $region33: #{tpu_custom_call.1} parent=11 // pred_check
          %p248 = pneg %p172
        $region34: #{tpu_custom_call.1} parent=11 // pred_check_branch
          %250 = sbr.rel (%p248) target = $region36
        $region35: #{tpu_custom_call.1} parent=11 // pred_region
          _
        $region36: #{tpu_custom_call.1} parent=11 // pred_fallthru
          _
      $region12: #{tpu_custom_call.1} parent=5 // pred_fallthru
        _
      %p251 = scmp.lt.s32.totalorder %s20, 2
      // Predicated region
      $region37: #{tpu_custom_call.1} parent=5 // pred_check
        %p252 = pneg %p251
      $region38: #{tpu_custom_call.1} parent=5 // pred_check_branch
        %254 = sbr.rel (%p252) target = $region40
      $region39: #{tpu_custom_call.1} parent=5 // pred_region
        // Predicated region
        $region41: #{tpu_custom_call.1} parent=39 // pred_check
          %p255 = pneg %p40
        $region42: #{tpu_custom_call.1} parent=39 // pred_check_branch
          %257 = sbr.rel (%p255) target = $region44
        $region43: #{tpu_custom_call.1} parent=39 // pred_region
          %s258 = sand.u32 %s30, 1
          %s259 = scalar_lea.sflag [#allocation3], %s258
          %s260 = sand.u32 %s30, 1
          %s261 = smul.addr %s260, 8
          %s262 = scalar_lea.vmem [#allocation2], %s261
          %s264 = ssub.s32 128, 128
          %265 = vsyncadd %s259, %s264
          %s266 = smul.addr %s20, 128
          %s267 = scalar_lea.hbm %s0, %s266
          %s269 = sshll.u32 %s262, 4
          %s270 = int_to_ptr.vmem [resolvable:$true] %s269
          %272 = dma.hbm_to_vmem [thread:$0]  %s267, 128, %s270, %s259
        $region44: #{tpu_custom_call.1} parent=39 // pred_fallthru
          _
      $region40: #{tpu_custom_call.1} parent=5 // pred_fallthru
        _
      %p273 = scmp.le.s32.totalorder 1, %s20
      %p274 = scmp.lt.s32.totalorder %s20, 3
      %p275 = pnand %p273, %p274
      %p276 = pneg %p275
      // Predicated region
      $region45: #{tpu_custom_call.1} parent=5 // pred_check
        _
      $region46: #{tpu_custom_call.1} parent=5 // pred_check_branch
        %278 = sbr.rel (%p275) target = $region48
      $region47: #{tpu_custom_call.1} parent=5 // pred_region
        %s279 = ssub.s32 %s20, 1
        %s280 = sand.u32 %s33, 1
        %s281 = scalar_lea.sflag [#allocation3], %s280
        %s282 = sand.u32 %s33, 1
        %s283 = smul.addr %s282, 8
        %s284 = scalar_lea.vmem [#allocation2], %s283
        // Predicated region
        $region49: #{tpu_custom_call.1} parent=47 // pred_check
          %p285 = pneg %p46
        $region50: #{tpu_custom_call.1} parent=47 // pred_check_branch
          %287 = sbr.rel (%p285) target = $region52
        $region51: #{tpu_custom_call.1} parent=47 // pred_region
          %288 = dma.done %s281, 128
        $region52: #{tpu_custom_call.1} parent=47 // pred_fallthru
          _
        // Predicated region
        $region53: #{tpu_custom_call.1} parent=47 // pred_check
          %p289 = pneg %p67
        $region54: #{tpu_custom_call.1} parent=47 // pred_check_branch
          %291 = sbr.rel (%p289) target = $region56
        $region55: #{tpu_custom_call.1} parent=47 // pred_region
          %292 = dma.done [#allocation6], 2048
        $region56: #{tpu_custom_call.1} parent=47 // pred_fallthru
          _
        // Predicated region
        $region57: #{tpu_custom_call.1} parent=47 // pred_check
          %p293 = pneg %p109
        $region58: #{tpu_custom_call.1} parent=47 // pred_check_branch
          %295 = sbr.rel (%p293) target = $region60
        $region59: #{tpu_custom_call.1} parent=47 // pred_region
          %296 = dma.done [#allocation6], 2048
        $region60: #{tpu_custom_call.1} parent=47 // pred_fallthru
          _
        %s297 = sand.u32 %s33, 1
        %s298 = scalar_lea.sflag [#allocation3], %s297
        %s299 = sand.u32 %s33, 1
        %s300 = smul.addr %s299, 8
        %s301 = scalar_lea.vmem [#allocation2], %s300
        %p302 = pneg %p46
        %p303 = pneg %p43
        %p304 = pneg %p67
        %p305 = pneg %p64
        %p306 = pneg %p88
        %p307 = pneg %p85
        %p308 = pneg %p109
        %p309 = pneg %p106
        %p310 = pneg %p130
        %p311 = pneg %p127
        %p312 = pneg %p151
        %p313 = pneg %p148
        %p314 = pneg %p172
        %p315 = pneg %p169
        %p316 = pneg %p198
        %p317 = pneg %p195
        %s318 = sand.u32 %s185, 1
        %s319 = scalar_lea.sflag [#allocation4], %s318
        %s320 = sand.u32 %s185, 1
        %s321 = smul.addr %s320, 8
        %s322 = scalar_lea.vmem [#allocation8], %s321
        %v324 = vld [vmem:[%s284] sm:$0xff]
        %325 = vadd.xlane.f32.xlu0 %v324
        %v326 = vpop.xlane.xlu0 %325
        %v327 = vrcp.pop 128.0
        %v328 = vmul.f32 %v326, %v327
        %v329 = vsub.f32 %v324, %v328
        %v330 = vmul.f32 %v329, %v329
        %331 = vadd.xlane.f32.xlu0 %v330
        %v332 = vpop.xlane.xlu0 %331
        %v333 = vmul.f32 %v332, %v327
        %v334 = vadd.f32 %v333, 1e-06
        %v335 = vrsqrt.pop %v334
        %v336 = vmul.f32 %v329, %v335
        %v337 = vld [vmem:[%s5] sm:$0x1]
        %v339 = vlaneseq
        %v340 = vshrl.u32 %v339, 7
        %v341 = vsub.s32 0, %v340
        %v342 = vrot.slane %v337, %v341
        %v344 = vmul.f32 %v336, %v342
        %v345 = vld [vmem:[%s6] sm:$0x1]
        %v347 = vlaneseq
        %v348 = vshrl.u32 %v347, 7
        %v349 = vsub.s32 0, %v348
        %v350 = vrot.slane %v345, %v349
        %v352 = vadd.f32 %v344, %v350
        %v353 = vpack.c.bf16 %v352, %v352
        %v354 = vld [vmem:[#allocation5] sm:$0xff]
        %v355 = vld [vmem:[#allocation5 + $0x8] sm:$0xff]
        %v356 = vld [vmem:[#allocation5 + $0x10] sm:$0xff]
        %v357 = vld [vmem:[#allocation5 + $0x18] sm:$0xff]
        %v358 = vld [vmem:[#allocation5 + $0x20] sm:$0xff]
        %v359 = vld [vmem:[#allocation5 + $0x28] sm:$0xff]
        %v360 = vld [vmem:[#allocation5 + $0x30] sm:$0xff]
        %v361 = vld [vmem:[#allocation5 + $0x38] sm:$0xff]
        %v362 = vld [vmem:[#allocation5 + $0x40] sm:$0xff]
        %v363 = vld [vmem:[#allocation5 + $0x48] sm:$0xff]
        %v364 = vld [vmem:[#allocation5 + $0x50] sm:$0xff]
        %v365 = vld [vmem:[#allocation5 + $0x58] sm:$0xff]
        %v366 = vld [vmem:[#allocation5 + $0x60] sm:$0xff]
        %v367 = vld [vmem:[#allocation5 + $0x68] sm:$0xff]
        %v368 = vld [vmem:[#allocation5 + $0x70] sm:$0xff]
        %v369 = vld [vmem:[#allocation5 + $0x78] sm:$0xff]
        %v370 = vld [vmem:[%s2] sm:$0x3]
        %v372 = vlaneseq
        %v373 = vshrl.u32 %v372, 7
        %v374 = vsub.s32 0, %v373
        %v375 = vrot.slane %v370, %v374
        %v376 = vlaneseq
        %v377 = vshrl.u32 %v376, 7
        %v378 = vsub.s32 1, %v377
        %v379 = vrot.slane %v370, %v378
        %v398 = vunpack.c.l.b16 %v354
        %v399 = vunpack.c.h.b16 %v354
        %v400 = vunpack.c.l.b16 %v355
        %v401 = vunpack.c.h.b16 %v355
        %v402 = vunpack.c.l.b16 %v356
        %v403 = vunpack.c.h.b16 %v356
        %v404 = vunpack.c.l.b16 %v357
        %v405 = vunpack.c.h.b16 %v357
        %v406 = vunpack.c.l.b16 %v358
        %v407 = vunpack.c.h.b16 %v358
        %v408 = vunpack.c.l.b16 %v359
        %v409 = vunpack.c.h.b16 %v359
        %v410 = vunpack.c.l.b16 %v360
        %v411 = vunpack.c.h.b16 %v360
        %v412 = vunpack.c.l.b16 %v361
        %v413 = vunpack.c.h.b16 %v361
        %v414 = vunpack.c.l.b16 %v362
        %v415 = vunpack.c.h.b16 %v362
        %v416 = vunpack.c.l.b16 %v363
        %v417 = vunpack.c.h.b16 %v363
        %v418 = vunpack.c.l.b16 %v364
        %v419 = vunpack.c.h.b16 %v364
        %v420 = vunpack.c.l.b16 %v365
        %v421 = vunpack.c.h.b16 %v365
        %v422 = vunpack.c.l.b16 %v366
        %v423 = vunpack.c.h.b16 %v366
        %v424 = vunpack.c.l.b16 %v367
        %v425 = vunpack.c.h.b16 %v367
        %v426 = vunpack.c.l.b16 %v368
        %v427 = vunpack.c.h.b16 %v368
        %v428 = vunpack.c.l.b16 %v369
        %v429 = vunpack.c.h.b16 %v369
        %v430 = vpack.c.b16 %v400, %v398
        %v431 = vpack.c.b16 %v401, %v399
        %v432 = vpack.c.b16 %v404, %v402
        %v433 = vpack.c.b16 %v405, %v403
        %v434 = vpack.c.b16 %v408, %v406
        %v435 = vpack.c.b16 %v409, %v407
        %v436 = vpack.c.b16 %v412, %v410
        %v437 = vpack.c.b16 %v413, %v411
        %v438 = vpack.c.b16 %v416, %v414
        %v439 = vpack.c.b16 %v417, %v415
        %v440 = vpack.c.b16 %v420, %v418
        %v441 = vpack.c.b16 %v421, %v419
        %v442 = vpack.c.b16 %v424, %v422
        %v443 = vpack.c.b16 %v425, %v423
        %v444 = vpack.c.b16 %v428, %v426
        %v445 = vpack.c.b16 %v429, %v427
        %462 = vmatprep.subr.bf16.mxu0 %v445
        %463 = vmatpush1.bf16.msra.mxu0 %v444
        %464 = vmatprep.subr.bf16.mxu0 %v443
        %465 = vmatpush1.bf16.msra.mxu0 %v442
        %466 = vmatprep.subr.bf16.mxu0 %v441
        %467 = vmatpush1.bf16.msra.mxu0 %v440
        %468 = vmatprep.subr.bf16.mxu0 %v439
        %469 = vmatpush1.bf16.msra.mxu0 %v438
        %470 = vmatprep.subr.bf16.mxu0 %v437
        %471 = vmatpush1.bf16.msra.mxu0 %v436
        %472 = vmatprep.subr.bf16.mxu0 %v435
        %473 = vmatpush1.bf16.msra.mxu0 %v434
        %474 = vmatprep.subr.bf16.mxu0 %v433
        %475 = vmatpush1.bf16.msra.mxu0 %v432
        %476 = vmatprep.subr.bf16.mxu0 %v431
        %477 = vmatpush1.bf16.msra.mxu0 %v430
        %478 = vmatprep.subr.bf16.mxu0 0
        %479 = vmatpush2.bf16.msra.mxu0 0
        %480 = vmatprep.subr.bf16.mxu0 0
        %481 = vmatpush2.bf16.msra.mxu0 0
        %482 = vmatprep.subr.bf16.mxu0 0
        %483 = vmatpush2.bf16.msra.mxu0 0
        %484 = vmatprep.subr.bf16.mxu0 0
        %485 = vmatpush2.bf16.msra.mxu0 0
        %486 = vmatprep.subr.bf16.mxu0 0
        %487 = vmatpush2.bf16.msra.mxu0 0
        %488 = vmatprep.subr.bf16.mxu0 0
        %489 = vmatpush2.bf16.msra.mxu0 0
        %490 = vmatprep.subr.bf16.mxu0 0
        %491 = vmatpush2.bf16.msra.mxu0 0
        %492 = vmatprep.subr.bf16.mxu0 0
        %493 = vmatpush2.bf16.msra.mxu0 0
        %494 = vmatprep.mubr.bf16.mxu0 0
        %495 = vmatmul.mubr.bf16.gmra.mxu0 %v353
        %v496 = vpop.f32.mrf.mxu0
        %v497 = vadd.f32 %v375, %v496
        %v498 = vpop.f32.mrf.mxu0
        %v499 = vadd.f32 %v379, %v498
        %v500 = vpop.f32.mrf.mxu0
        %v501 = vpop.f32.mrf.mxu0
        %502 = vdwg.mxu0
        %v503 = vmax.f32 %v497, 0.0
        %v504 = vmax.f32 %v499, 0.0
        %v505 = vpack.c.bf16 %v503, %v503
        %v506 = vpack.c.bf16 %v504, %v504
        %v507 = vld [vmem:[#allocation7] sm:$0xf]
        %v508 = vld [vmem:[#allocation7 + $0x4] sm:$0xf]
        %v509 = vld [vmem:[#allocation7 + $0x8] sm:$0xf]
        %v510 = vld [vmem:[#allocation7 + $0xc] sm:$0xf]
        %v511 = vld [vmem:[#allocation7 + $0x10] sm:$0xf]
        %v512 = vld [vmem:[#allocation7 + $0x14] sm:$0xf]
        %v513 = vld [vmem:[#allocation7 + $0x18] sm:$0xf]
        %v514 = vld [vmem:[#allocation7 + $0x1c] sm:$0xf]
        %v515 = vld [vmem:[#allocation7 + $0x20] sm:$0xf]
        %v516 = vld [vmem:[#allocation7 + $0x24] sm:$0xf]
        %v517 = vld [vmem:[#allocation7 + $0x28] sm:$0xf]
        %v518 = vld [vmem:[#allocation7 + $0x2c] sm:$0xf]
        %v519 = vld [vmem:[#allocation7 + $0x30] sm:$0xf]
        %v520 = vld [vmem:[#allocation7 + $0x34] sm:$0xf]
        %v521 = vld [vmem:[#allocation7 + $0x38] sm:$0xf]
        %v522 = vld [vmem:[#allocation7 + $0x3c] sm:$0xf]
        %v523 = vld [vmem:[#allocation7 + $0x40] sm:$0xf]
        %v524 = vld [vmem:[#allocation7 + $0x44] sm:$0xf]
        %v525 = vld [vmem:[#allocation7 + $0x48] sm:$0xf]
        %v526 = vld [vmem:[#allocation7 + $0x4c] sm:$0xf]
        %v527 = vld [vmem:[#allocation7 + $0x50] sm:$0xf]
        %v528 = vld [vmem:[#allocation7 + $0x54] sm:$0xf]
        %v529 = vld [vmem:[#allocation7 + $0x58] sm:$0xf]
        %v530 = vld [vmem:[#allocation7 + $0x5c] sm:$0xf]
        %v531 = vld [vmem:[#allocation7 + $0x60] sm:$0xf]
        %v532 = vld [vmem:[#allocation7 + $0x64] sm:$0xf]
        %v533 = vld [vmem:[#allocation7 + $0x68] sm:$0xf]
        %v534 = vld [vmem:[#allocation7 + $0x6c] sm:$0xf]
        %v535 = vld [vmem:[#allocation7 + $0x70] sm:$0xf]
        %v536 = vld [vmem:[#allocation7 + $0x74] sm:$0xf]
        %v537 = vld [vmem:[#allocation7 + $0x78] sm:$0xf]
        %v538 = vld [vmem:[#allocation7 + $0x7c] sm:$0xf]
        %v539 = vld [vmem:[%s4] sm:$0x1]
        %v541 = vlaneseq
        %v542 = vshrl.u32 %v541, 7
        %v543 = vsub.s32 0, %v542
        %v544 = vrot.slane %v539, %v543
        %v578 = vunpack.c.l.b16 %v507
        %v579 = vunpack.c.l.b16 %v508
        %v580 = vunpack.c.l.b16 %v509
        %v581 = vunpack.c.l.b16 %v510
        %v582 = vunpack.c.l.b16 %v511
        %v583 = vunpack.c.l.b16 %v512
        %v584 = vunpack.c.l.b16 %v513
        %v585 = vunpack.c.l.b16 %v514
        %v586 = vunpack.c.l.b16 %v515
        %v587 = vunpack.c.l.b16 %v516
        %v588 = vunpack.c.l.b16 %v517
        %v589 = vunpack.c.l.b16 %v518
        %v590 = vunpack.c.l.b16 %v519
        %v591 = vunpack.c.l.b16 %v520
        %v592 = vunpack.c.l.b16 %v521
        %v593 = vunpack.c.l.b16 %v522
        %v594 = vunpack.c.l.b16 %v523
        %v595 = vunpack.c.l.b16 %v524
        %v596 = vunpack.c.l.b16 %v525
        %v597 = vunpack.c.l.b16 %v526
        %v598 = vunpack.c.l.b16 %v527
        %v599 = vunpack.c.l.b16 %v528
        %v600 = vunpack.c.l.b16 %v529
        %v601 = vunpack.c.l.b16 %v530
        %v602 = vunpack.c.l.b16 %v531
        %v603 = vunpack.c.l.b16 %v532
        %v604 = vunpack.c.l.b16 %v533
        %v605 = vunpack.c.l.b16 %v534
        %v606 = vunpack.c.l.b16 %v535
        %v607 = vunpack.c.l.b16 %v536
        %v608 = vunpack.c.l.b16 %v537
        %v609 = vunpack.c.l.b16 %v538
        %v610 = vpack.c.b16 %v579, %v578
        %v611 = vpack.c.b16 %v581, %v580
        %v612 = vpack.c.b16 %v583, %v582
        %v613 = vpack.c.b16 %v585, %v584
        %v614 = vpack.c.b16 %v587, %v586
        %v615 = vpack.c.b16 %v589, %v588
        %v616 = vpack.c.b16 %v591, %v590
        %v617 = vpack.c.b16 %v593, %v592
        %v618 = vpack.c.b16 %v595, %v594
        %v619 = vpack.c.b16 %v597, %v596
        %v620 = vpack.c.b16 %v599, %v598
        %v621 = vpack.c.b16 %v601, %v600
        %v622 = vpack.c.b16 %v603, %v602
        %v623 = vpack.c.b16 %v605, %v604
        %v624 = vpack.c.b16 %v607, %v606
        %v625 = vpack.c.b16 %v609, %v608
        %642 = vmatprep.subr.bf16.mxu0 0
        %643 = vmatpush1.bf16.msra.mxu0 %v617
        %644 = vmatprep.subr.bf16.mxu0 0
        %645 = vmatpush1.bf16.msra.mxu0 %v616
        %646 = vmatprep.subr.bf16.mxu0 0
        %647 = vmatpush1.bf16.msra.mxu0 %v615
        %648 = vmatprep.subr.bf16.mxu0 0
        %649 = vmatpush1.bf16.msra.mxu0 %v614
        %650 = vmatprep.subr.bf16.mxu0 0
        %651 = vmatpush1.bf16.msra.mxu0 %v613
        %652 = vmatprep.subr.bf16.mxu0 0
        %653 = vmatpush1.bf16.msra.mxu0 %v612
        %654 = vmatprep.subr.bf16.mxu0 0
        %655 = vmatpush1.bf16.msra.mxu0 %v611
        %656 = vmatprep.subr.bf16.mxu0 0
        %657 = vmatpush1.bf16.msra.mxu0 %v610
        %658 = vmatprep.subr.bf16.mxu0 0
        %659 = vmatpush2.bf16.msra.mxu0 %v625
        %660 = vmatprep.subr.bf16.mxu0 0
        %661 = vmatpush2.bf16.msra.mxu0 %v624
        %662 = vmatprep.subr.bf16.mxu0 0
        %663 = vmatpush2.bf16.msra.mxu0 %v623
        %664 = vmatprep.subr.bf16.mxu0 0
        %665 = vmatpush2.bf16.msra.mxu0 %v622
        %666 = vmatprep.subr.bf16.mxu0 0
        %667 = vmatpush2.bf16.msra.mxu0 %v621
        %668 = vmatprep.subr.bf16.mxu0 0
        %669 = vmatpush2.bf16.msra.mxu0 %v620
        %670 = vmatprep.subr.bf16.mxu0 0
        %671 = vmatpush2.bf16.msra.mxu0 %v619
        %672 = vmatprep.subr.bf16.mxu0 0
        %673 = vmatpush2.bf16.msra.mxu0 %v618
        %674 = vmatprep.mubr.bf16.mxu0 %v506
        %675 = vmatmul.mubr.bf16.gmra.mxu0 %v505
        %v676 = vpop.f32.mrf.mxu0
        %v677 = vadd.f32 %v544, %v676
        %v678 = vpop.f32.mrf.mxu0
        %v679 = vpop.f32.mrf.mxu0
        %v680 = vpop.f32.mrf.mxu0
        %681 = vdwg.mxu0
        %v682 = vadd.f32 %v677, %v324
        %683 = vst [vmem:[%s322] sm:$0xff] %v682
        %s684 = sand.u32 %s185, 1
        %s685 = scalar_lea.sflag [#allocation4], %s684
        %s686 = sand.u32 %s185, 1
        %s687 = smul.addr %s686, 8
        %s688 = scalar_lea.vmem [#allocation8], %s687
        // Predicated region
        $region61: #{tpu_custom_call.1} parent=47 // pred_check
          %p689 = pneg %p195
        $region62: #{tpu_custom_call.1} parent=47 // pred_check_branch
          %691 = sbr.rel (%p689) target = $region64
        $region63: #{tpu_custom_call.1} parent=47 // pred_region
          %s693 = ssub.s32 128, 128
          %694 = vsyncadd %s685, %s693
          %s695 = smul.addr %s25, 128
          %s696 = scalar_lea.hbm %s7, %s695
          %s698 = sshll.u32 %s688, 4
          %s699 = int_to_ptr.vmem [resolvable:$true] %s698
          %701 = dma.vmem_to_hbm [thread:$0]  %s699, 128, %s696, %s685
        $region64: #{tpu_custom_call.1} parent=47 // pred_fallthru
          _
      $region48: #{tpu_custom_call.1} parent=5 // pred_fallthru
        _
      %p702 = scmp.le.s32.totalorder 2, %s20
      // Predicated region
      $region65: #{tpu_custom_call.1} parent=5 // pred_check
        %p703 = pneg %p702
      $region66: #{tpu_custom_call.1} parent=5 // pred_check_branch
        %705 = sbr.rel (%p703) target = $region68
      $region67: #{tpu_custom_call.1} parent=5 // pred_region
        %s706 = ssub.s32 %s20, 2
        // Predicated region
        $region69: #{tpu_custom_call.1} parent=67 // pred_check
          %p707 = pneg %p201
        $region70: #{tpu_custom_call.1} parent=67 // pred_check_branch
          %709 = sbr.rel (%p707) target = $region72
        $region71: #{tpu_custom_call.1} parent=67 // pred_region
          %s710 = sand.u32 %s186, 1
          %s711 = scalar_lea.sflag [#allocation4], %s710
          %s712 = sand.u32 %s186, 1
          %s713 = smul.addr %s712, 8
          %s714 = scalar_lea.vmem [#allocation8], %s713
          %715 = dma.done %s711, 128
        $region72: #{tpu_custom_call.1} parent=67 // pred_fallthru
          _
      $region68: #{tpu_custom_call.1} parent=5 // pred_fallthru
        _
    $region6: #{tpu_custom_call.1} parent=1 // loop_footer
      %s24 = sadd.s32 1, %s20
    $region7: #{tpu_custom_call.1} parent=1 // loop_footer_branch
      %19 = sbr.rel target = $region3
    $region8: #{tpu_custom_call.1} parent=1 // loop_exit
      _
    %716 = vsyncpa [#allocation3], 1
    %s717 = scalar_lea.sflag [#allocation3], 1
    %718 = vsyncpa %s717, 1
    %719 = vsyncpa [#allocation6], 1
    %720 = vsyncpa [#allocation4], 1
    %s721 = scalar_lea.sflag [#allocation4], 1
    %722 = vsyncpa %s721, 1

// kernel: tpu_custom_call.1
$region0: #{tpu_custom_call.1}
  #allocation0 [shape = 'u32[]', space=smem, size = 0x4, offset = 0x4, fixed_abs, tag = 'smem constant byte address 0x4 - core index']
  #allocation1 [shape = 'u32[144,128]{1,0:T(1,128)}', space=vmem, size = 0x12000, scoped, tag = 'internal scratch']
  %s0 = inlined_call_operand.hbm [shape: f32[16,128], index: 0, kind: input, shape index: {}]
  %s1 = inlined_call_operand.hbm [shape: bf16[128,256], index: 1, kind: input, shape index: {}]
  %s2 = inlined_call_operand.vmem [shape: f32[1,256], index: 2, kind: input, shape index: {}]
  %s3 = inlined_call_operand.hbm [shape: bf16[256,128], index: 3, kind: input, shape index: {}]
  %s4 = inlined_call_operand.vmem [shape: f32[1,128], index: 4, kind: input, shape index: {}]
  %s5 = inlined_call_operand.vmem [shape: f32[1,128], index: 5, kind: input, shape index: {}]
  %s6 = inlined_call_operand.vmem [shape: f32[1,128], index: 6, kind: input, shape index: {}]
  %s7 = inlined_call_operand.hbm [shape: f32[16,128], index: 7, kind: output, shape index: {}]
  %s8 = sld [smem:[#allocation0]]
  $region73: #{tpu_custom_call.1} parent=0
    _
  %s10 = ssub.s32 1, %s8
  %s11 = scalar_select 0, %s10, %s8
  $region1: #{tpu_custom_call.1} parent=0
    #allocation2 [shape = 'u8[8192]{0}', space=vmem, size = 0x2000, scoped, tag = 'input window, operand 0']
    #allocation3 [shape = 's32[2]{0}', space=sflag, size = 0x8, scoped, tag = 'scoped memory for tpu_custom_call.1']
    #allocation4 [shape = 's32[2]{0}', space=sflag, size = 0x8, scoped, tag = 'scoped memory for tpu_custom_call.1']
    #allocation5 [shape = 'u8[65536]{0}', space=vmem, size = 0x10000, scoped, tag = 'input window, operand 1, single buffered']
    #allocation6 [shape = 's32[1]{0}', space=sflag, size = 0x4, scoped, tag = 'scoped memory for tpu_custom_call.1']
    #allocation7 [shape = 'u8[65536]{0}', space=vmem, size = 0x10000, scoped, tag = 'input window, operand 3, single buffered']
    #allocation8 [shape = 'u8[8192]{0}', space=vmem, size = 0x2000, scoped, tag = 'output window, operand 0']
    %12 = vsyncpa [#allocation3], 0
    %s13 = scalar_lea.sflag [#allocation3], 1
    %14 = vsyncpa %s13, 0
    %15 = vsyncpa [#allocation6], 0
    %16 = vsyncpa [#allocation4], 0
    %s17 = scalar_lea.sflag [#allocation4], 1
    %18 = vsyncpa %s17, 0
    loop: start=0, step=1, limit=4
    $region2: #{tpu_custom_call.1} parent=1 // loop_pre_header
      _
    $region3: #{tpu_custom_call.1} parent=1 // loop_header
      %s20 = sphi 0, %s24
      %p21 = scmp.ge.s32.totalorder %s20, 4
      %s30 = sphi 0, %s32
      %s33 = sphi 0, %s30
      %s34 = sphi 0, %s33
      %s50 = sphi 0, %s34
      %s54 = sphi 0, %s54
      %s56 = sphi 0, %s54
      %s57 = sphi 0, %s56
      %s71 = sphi 0, %s57
      %s75 = sphi 0, %s75
      %s77 = sphi 0, %s75
      %s78 = sphi 0, %s77
      %s92 = sphi 0, %s78
      %s96 = sphi 0, %s96
      %s98 = sphi 0, %s96
      %s99 = sphi 0, %s98
      %s113 = sphi 0, %s99
      %s117 = sphi 0, %s117
      %s119 = sphi 0, %s117
      %s120 = sphi 0, %s119
      %s134 = sphi 0, %s120
      %s138 = sphi 0, %s138
      %s140 = sphi 0, %s138
      %s141 = sphi 0, %s140
      %s155 = sphi 0, %s141
      %s159 = sphi 0, %s159
      %s161 = sphi 0, %s159
      %s162 = sphi 0, %s161
      %s176 = sphi 0, %s162
      %s182 = sphi 0, %s184
      %s185 = sphi 0, %s182
      %s186 = sphi 0, %s185
      %s202 = sphi 0, %s186
    $region4: #{tpu_custom_call.1} parent=1 // loop_header_branch
      %23 = sbr.rel (%p21) target = $region8
    $region5: #{tpu_custom_call.1} parent=1 // loop_body
      %s25 = ssub.s32 %s20, 1
      %s26 = ssub.s32 %s20, 2
      %s27 = sadd.s32 %s20, 1
      %s28 = ssub.s32 %s20, %s27
      %p29 = scmp.eq.s32.totalorder %s28, 0
      %s31 = sadd.s32 %s30, 1
      %s32 = scalar_select %p29, %s30, %s31
      %p35 = pneg %p29
      %p36 = scmp.eq.s32.totalorder %s20, 1
      %p37 = por %p35, %p36
      %p38 = scmp.ne.s32.totalorder %s30, %s33
      %p39 = scmp.eq.s32.totalorder %s20, 0
      %p40 = por %p38, %p39
      %p41 = scmp.ne.s32.totalorder %s30, %s33
      %p42 = scmp.eq.s32.totalorder %s25, 1
      %p43 = por %p41, %p42
      %p44 = scmp.ne.s32.totalorder %s33, %s34
      %p45 = scmp.eq.s32.totalorder %s25, 0
      %p46 = por %p44, %p45
      %p47 = scmp.ne.s32.totalorder %s33, %s34
      %p48 = scmp.eq.s32.totalorder %s26, 1
      %p49 = por %p47, %p48
      %p51 = scmp.ne.s32.totalorder %s34, %s50
      %p52 = scmp.eq.s32.totalorder %s26, 0
      %p53 = por %p51, %p52
      %s55 = sadd.s32 %s54, 1
      %p58 = scmp.eq.s32.totalorder %s20, 1
      %p59 = scmp.ne.s32.totalorder %s54, %s56
      %p60 = scmp.eq.s32.totalorder %s20, 0
      %p61 = por %p59, %p60
      %p62 = scmp.ne.s32.totalorder %s54, %s56
      %p63 = scmp.eq.s32.totalorder %s25, 1
      %p64 = por %p62, %p63
      %p65 = scmp.ne.s32.totalorder %s56, %s57
      %p66 = scmp.eq.s32.totalorder %s25, 0
      %p67 = por %p65, %p66
      %p68 = scmp.ne.s32.totalorder %s56, %s57
      %p69 = scmp.eq.s32.totalorder %s26, 1
      %p70 = por %p68, %p69
      %p72 = scmp.ne.s32.totalorder %s57, %s71
      %p73 = scmp.eq.s32.totalorder %s26, 0
      %p74 = por %p72, %p73
      %s76 = sadd.s32 %s75, 1
      %p79 = scmp.eq.s32.totalorder %s20, 1
      %p80 = scmp.ne.s32.totalorder %s75, %s77
      %p81 = scmp.eq.s32.totalorder %s20, 0
      %p82 = por %p80, %p81
      %p83 = scmp.ne.s32.totalorder %s75, %s77
      %p84 = scmp.eq.s32.totalorder %s25, 1
      %p85 = por %p83, %p84
      %p86 = scmp.ne.s32.totalorder %s77, %s78
      %p87 = scmp.eq.s32.totalorder %s25, 0
      %p88 = por %p86, %p87
      %p89 = scmp.ne.s32.totalorder %s77, %s78
      %p90 = scmp.eq.s32.totalorder %s26, 1
      %p91 = por %p89, %p90
      %p93 = scmp.ne.s32.totalorder %s78, %s92
      %p94 = scmp.eq.s32.totalorder %s26, 0
      %p95 = por %p93, %p94
      %s97 = sadd.s32 %s96, 1
      %p100 = scmp.eq.s32.totalorder %s20, 1
      %p101 = scmp.ne.s32.totalorder %s96, %s98
      %p102 = scmp.eq.s32.totalorder %s20, 0
      %p103 = por %p101, %p102
      %p104 = scmp.ne.s32.totalorder %s96, %s98
      %p105 = scmp.eq.s32.totalorder %s25, 1
      %p106 = por %p104, %p105
      %p107 = scmp.ne.s32.totalorder %s98, %s99
      %p108 = scmp.eq.s32.totalorder %s25, 0
      %p109 = por %p107, %p108
      %p110 = scmp.ne.s32.totalorder %s98, %s99
      %p111 = scmp.eq.s32.totalorder %s26, 1
      %p112 = por %p110, %p111
      %p114 = scmp.ne.s32.totalorder %s99, %s113
      %p115 = scmp.eq.s32.totalorder %s26, 0
      %p116 = por %p114, %p115
      %s118 = sadd.s32 %s117, 1
      %p121 = scmp.eq.s32.totalorder %s20, 1
      %p122 = scmp.ne.s32.totalorder %s117, %s119
      %p123 = scmp.eq.s32.totalorder %s20, 0
      %p124 = por %p122, %p123
      %p125 = scmp.ne.s32.totalorder %s117, %s119
      %p126 = scmp.eq.s32.totalorder %s25, 1
      %p127 = por %p125, %p126
      %p128 = scmp.ne.s32.totalorder %s119, %s120
      %p129 = scmp.eq.s32.totalorder %s25, 0
      %p130 = por %p128, %p129
      %p131 = scmp.ne.s32.totalorder %s119, %s120
      %p132 = scmp.eq.s32.totalorder %s26, 1
      %p133 = por %p131, %p132
      %p135 = scmp.ne.s32.totalorder %s120, %s134
      %p136 = scmp.eq.s32.totalorder %s26, 0
      %p137 = por %p135, %p136
      %s139 = sadd.s32 %s138, 1
      %p142 = scmp.eq.s32.totalorder %s20, 1
      %p143 = scmp.ne.s32.totalorder %s138, %s140
      %p144 = scmp.eq.s32.totalorder %s20, 0
      %p145 = por %p143, %p144
      %p146 = scmp.ne.s32.totalorder %s138, %s140
      %p147 = scmp.eq.s32.totalorder %s25, 1
      %p148 = por %p146, %p147
      %p149 = scmp.ne.s32.totalorder %s140, %s141
      %p150 = scmp.eq.s32.totalorder %s25, 0
      %p151 = por %p149, %p150
      %p152 = scmp.ne.s32.totalorder %s140, %s141
      %p153 = scmp.eq.s32.totalorder %s26, 1
      %p154 = por %p152, %p153
      %p156 = scmp.ne.s32.totalorder %s141, %s155
      %p157 = scmp.eq.s32.totalorder %s26, 0
      %p158 = por %p156, %p157
      %s160 = sadd.s32 %s159, 1
      %p163 = scmp.eq.s32.totalorder %s20, 1
      %p164 = scmp.ne.s32.totalorder %s159, %s161
      %p165 = scmp.eq.s32.totalorder %s20, 0
      %p166 = por %p164, %p165
      %p167 = scmp.ne.s32.totalorder %s159, %s161
      %p168 = scmp.eq.s32.totalorder %s25, 1
      %p169 = por %p167, %p168
      %p170 = scmp.ne.s32.totalorder %s161, %s162
      %p171 = scmp.eq.s32.totalorder %s25, 0
      %p172 = por %p170, %p171
      %p173 = scmp.ne.s32.totalorder %s161, %s162
      %p174 = scmp.eq.s32.totalorder %s26, 1
      %p175 = por %p173, %p174
      %p177 = scmp.ne.s32.totalorder %s162, %s176
      %p178 = scmp.eq.s32.totalorder %s26, 0
      %p179 = por %p177, %p178
      %s180 = ssub.s32 %s20, %s27
      %p181 = scmp.eq.s32.totalorder %s180, 0
      %s183 = sadd.s32 %s182, 1
      %s184 = scalar_select %p181, %s182, %s183
      %p187 = pneg %p181
      %p188 = scmp.eq.s32.totalorder %s20, 1
      %p189 = por %p187, %p188
      %p190 = scmp.ne.s32.totalorder %s182, %s185
      %p191 = scmp.eq.s32.totalorder %s20, 0
      %p192 = por %p190, %p191
      %p193 = scmp.ne.s32.totalorder %s182, %s185
      %p194 = scmp.eq.s32.totalorder %s25, 1
      %p195 = por %p193, %p194
      %p196 = scmp.ne.s32.totalorder %s185, %s186
      %p197 = scmp.eq.s32.totalorder %s25, 0
      %p198 = por %p196, %p197
      %p199 = scmp.ne.s32.totalorder %s185, %s186
      %p200 = scmp.eq.s32.totalorder %s26, 1
      %p201 = por %p199, %p200
      %p203 = scmp.ne.s32.totalorder %s186, %s202
      %p204 = scmp.eq.s32.totalorder %s26, 0
      %p205 = por %p203, %p204
      %p206 = scmp.le.s32.totalorder 1, %s20
      %p207 = scmp.lt.s32.totalorder %s20, 3
      %p208 = pnand %p206, %p207
      %p209 = pneg %p208
      // Predicated region
      $region9: #{tpu_custom_call.1} parent=5 // pred_check
        _
      $region10: #{tpu_custom_call.1} parent=5 // pred_check_branch
        %211 = sbr.rel (%p208) target = $region12
      $region11: #{tpu_custom_call.1} parent=5 // pred_region
        %s212 = ssub.s32 %s20, 1
        // Predicated region
        $region13: #{tpu_custom_call.1} parent=11 // pred_check
          %p213 = pneg %p67
        $region14: #{tpu_custom_call.1} parent=11 // pred_check_branch
          %215 = sbr.rel (%p213) target = $region16
        $region15: #{tpu_custom_call.1} parent=11 // pred_region
          %s217 = ssub.s32 2048, 2048
          %218 = vsyncadd [#allocation6], %s217
          %s219 = sshll.u32 [#allocation5], 4
          %s220 = int_to_ptr.vmem [resolvable:$true] %s219
          %225 = dma.hbm_to_vmem [thread:$0]  %s1, 2048, %s220, [#allocation6], 128, 128, 8
        $region16: #{tpu_custom_call.1} parent=11 // pred_fallthru
          _
        // Predicated region
        $region17: #{tpu_custom_call.1} parent=11 // pred_check
          %p226 = pneg %p88
        $region18: #{tpu_custom_call.1} parent=11 // pred_check_branch
          %228 = sbr.rel (%p226) target = $region20
        $region19: #{tpu_custom_call.1} parent=11 // pred_region
          _
        $region20: #{tpu_custom_call.1} parent=11 // pred_fallthru
          _
        // Predicated region
        $region21: #{tpu_custom_call.1} parent=11 // pred_check
          %p229 = pneg %p109
        $region22: #{tpu_custom_call.1} parent=11 // pred_check_branch
          %231 = sbr.rel (%p229) target = $region24
        $region23: #{tpu_custom_call.1} parent=11 // pred_region
          %s233 = ssub.s32 2048, 2048
          %234 = vsyncadd [#allocation6], %s233
          %s235 = sshll.u32 [#allocation7], 4
          %s236 = int_to_ptr.vmem [resolvable:$true] %s235
          %241 = dma.hbm_to_vmem [thread:$0]  %s3, 2048, %s236, [#allocation6], 64, 64, 4
        $region24: #{tpu_custom_call.1} parent=11 // pred_fallthru
          _
        // Predicated region
        $region25: #{tpu_custom_call.1} parent=11 // pred_check
          %p242 = pneg %p130
        $region26: #{tpu_custom_call.1} parent=11 // pred_check_branch
          %244 = sbr.rel (%p242) target = $region28
        $region27: #{tpu_custom_call.1} parent=11 // pred_region
          _
        $region28: #{tpu_custom_call.1} parent=11 // pred_fallthru
          _
        // Predicated region
        $region29: #{tpu_custom_call.1} parent=11 // pred_check
          %p245 = pneg %p151
        $region30: #{tpu_custom_call.1} parent=11 // pred_check_branch
          %247 = sbr.rel (%p245) target = $region32
        $region31: #{tpu_custom_call.1} parent=11 // pred_region
          _
        $region32: #{tpu_custom_call.1} parent=11 // pred_fallthru
          _
        // Predicated region
        $region33: #{tpu_custom_call.1} parent=11 // pred_check
          %p248 = pneg %p172
        $region34: #{tpu_custom_call.1} parent=11 // pred_check_branch
          %250 = sbr.rel (%p248) target = $region36
        $region35: #{tpu_custom_call.1} parent=11 // pred_region
          _
        $region36: #{tpu_custom_call.1} parent=11 // pred_fallthru
          _
      $region12: #{tpu_custom_call.1} parent=5 // pred_fallthru
        _
      %p251 = scmp.lt.s32.totalorder %s20, 2
      // Predicated region
      $region37: #{tpu_custom_call.1} parent=5 // pred_check
        %p252 = pneg %p251
      $region38: #{tpu_custom_call.1} parent=5 // pred_check_branch
        %254 = sbr.rel (%p252) target = $region40
      $region39: #{tpu_custom_call.1} parent=5 // pred_region
        // Predicated region
        $region41: #{tpu_custom_call.1} parent=39 // pred_check
          %p255 = pneg %p40
        $region42: #{tpu_custom_call.1} parent=39 // pred_check_branch
          %257 = sbr.rel (%p255) target = $region44
        $region43: #{tpu_custom_call.1} parent=39 // pred_region
          %s258 = sand.u32 %s30, 1
          %s259 = scalar_lea.sflag [#allocation3], %s258
          %s260 = sand.u32 %s30, 1
          %s261 = smul.addr %s260, 8
          %s262 = scalar_lea.vmem [#allocation2], %s261
          %s264 = ssub.s32 128, 128
          %265 = vsyncadd %s259, %s264
          %s266 = smul.addr %s20, 128
          %s267 = scalar_lea.hbm %s0, %s266
          %s269 = sshll.u32 %s262, 4
          %s270 = int_to_ptr.vmem [resolvable:$true] %s269
          %272 = dma.hbm_to_vmem [thread:$0]  %s267, 128, %s270, %s259
        $region44: #{tpu_custom_call.1} parent=39 // pred_fallthru
          _
      $region40: #{tpu_custom_call.1} parent=5 // pred_fallthru
        _
      %p273 = scmp.le.s32.totalorder 1, %s20
      %p274 = scmp.lt.s32.totalorder %s20, 3
      %p275 = pnand %p273, %p274
      %p276 = pneg %p275
      // Predicated region
      $region45: #{tpu_custom_call.1} parent=5 // pred_check
        _
      $region46: #{tpu_custom_call.1} parent=5 // pred_check_branch
        %278 = sbr.rel (%p275) target = $region48
      $region47: #{tpu_custom_call.1} parent=5 // pred_region
        %s279 = ssub.s32 %s20, 1
        %s280 = sand.u32 %s33, 1
        %s281 = scalar_lea.sflag [#allocation3], %s280
        %s282 = sand.u32 %s33, 1
        %s283 = smul.addr %s282, 8
        %s284 = scalar_lea.vmem [#allocation2], %s283
        // Predicated region
        $region49: #{tpu_custom_call.1} parent=47 // pred_check
          %p285 = pneg %p46
        $region50: #{tpu_custom_call.1} parent=47 // pred_check_branch
          %287 = sbr.rel (%p285) target = $region52
        $region51: #{tpu_custom_call.1} parent=47 // pred_region
          %288 = dma.done %s281, 128
        $region52: #{tpu_custom_call.1} parent=47 // pred_fallthru
          _
        // Predicated region
        $region53: #{tpu_custom_call.1} parent=47 // pred_check
          %p289 = pneg %p67
        $region54: #{tpu_custom_call.1} parent=47 // pred_check_branch
          %291 = sbr.rel (%p289) target = $region56
        $region55: #{tpu_custom_call.1} parent=47 // pred_region
          %292 = dma.done [#allocation6], 2048
        $region56: #{tpu_custom_call.1} parent=47 // pred_fallthru
          _
        // Predicated region
        $region57: #{tpu_custom_call.1} parent=47 // pred_check
          %p293 = pneg %p109
        $region58: #{tpu_custom_call.1} parent=47 // pred_check_branch
          %295 = sbr.rel (%p293) target = $region60
        $region59: #{tpu_custom_call.1} parent=47 // pred_region
          %296 = dma.done [#allocation6], 2048
        $region60: #{tpu_custom_call.1} parent=47 // pred_fallthru
          _
        %s297 = sand.u32 %s33, 1
        %s298 = scalar_lea.sflag [#allocation3], %s297
        %s299 = sand.u32 %s33, 1
        %s300 = smul.addr %s299, 8
        %s301 = scalar_lea.vmem [#allocation2], %s300
        %p302 = pneg %p46
        %p303 = pneg %p43
        %p304 = pneg %p67
        %p305 = pneg %p64
        %p306 = pneg %p88
        %p307 = pneg %p85
        %p308 = pneg %p109
        %p309 = pneg %p106
        %p310 = pneg %p130
        %p311 = pneg %p127
        %p312 = pneg %p151
        %p313 = pneg %p148
        %p314 = pneg %p172
        %p315 = pneg %p169
        %p316 = pneg %p198
        %p317 = pneg %p195
        %s318 = sand.u32 %s185, 1
        %s319 = scalar_lea.sflag [#allocation4], %s318
        %s320 = sand.u32 %s185, 1
        %s321 = smul.addr %s320, 8
        %s322 = scalar_lea.vmem [#allocation8], %s321
        %v324 = vld [vmem:[%s284] sm:$0xff]
        %325 = vadd.xlane.f32.xlu0 %v324
        %v326 = vpop.xlane.xlu0 %325
        %v327 = vrcp.pop 128.0
        %v328 = vmul.f32 %v326, %v327
        %v329 = vsub.f32 %v324, %v328
        %v330 = vmul.f32 %v329, %v329
        %331 = vadd.xlane.f32.xlu0 %v330
        %v332 = vpop.xlane.xlu0 %331
        %v333 = vmul.f32 %v332, %v327
        %v334 = vadd.f32 %v333, 1e-06
        %v335 = vrsqrt.pop %v334
        %v336 = vmul.f32 %v329, %v335
        %v337 = vld [vmem:[%s5] sm:$0x1]
        %v339 = vlaneseq
        %v340 = vshrl.u32 %v339, 7
        %v341 = vsub.s32 0, %v340
        %v342 = vrot.slane %v337, %v341
        %v344 = vmul.f32 %v336, %v342
        %v345 = vld [vmem:[%s6] sm:$0x1]
        %v347 = vlaneseq
        %v348 = vshrl.u32 %v347, 7
        %v349 = vsub.s32 0, %v348
        %v350 = vrot.slane %v345, %v349
        %v352 = vadd.f32 %v344, %v350
        %v353 = vpack.c.bf16 %v352, %v352
        %v354 = vld [vmem:[#allocation5] sm:$0xff]
        %v355 = vld [vmem:[#allocation5 + $0x8] sm:$0xff]
        %v356 = vld [vmem:[#allocation5 + $0x10] sm:$0xff]
        %v357 = vld [vmem:[#allocation5 + $0x18] sm:$0xff]
        %v358 = vld [vmem:[#allocation5 + $0x20] sm:$0xff]
        %v359 = vld [vmem:[#allocation5 + $0x28] sm:$0xff]
        %v360 = vld [vmem:[#allocation5 + $0x30] sm:$0xff]
        %v361 = vld [vmem:[#allocation5 + $0x38] sm:$0xff]
        %v362 = vld [vmem:[#allocation5 + $0x40] sm:$0xff]
        %v363 = vld [vmem:[#allocation5 + $0x48] sm:$0xff]
        %v364 = vld [vmem:[#allocation5 + $0x50] sm:$0xff]
        %v365 = vld [vmem:[#allocation5 + $0x58] sm:$0xff]
        %v366 = vld [vmem:[#allocation5 + $0x60] sm:$0xff]
        %v367 = vld [vmem:[#allocation5 + $0x68] sm:$0xff]
        %v368 = vld [vmem:[#allocation5 + $0x70] sm:$0xff]
        %v369 = vld [vmem:[#allocation5 + $0x78] sm:$0xff]
        %v370 = vld [vmem:[%s2] sm:$0x3]
        %v372 = vlaneseq
        %v373 = vshrl.u32 %v372, 7
        %v374 = vsub.s32 0, %v373
        %v375 = vrot.slane %v370, %v374
        %v376 = vlaneseq
        %v377 = vshrl.u32 %v376, 7
        %v378 = vsub.s32 1, %v377
        %v379 = vrot.slane %v370, %v378
        %v398 = vunpack.c.l.b16 %v354
        %v399 = vunpack.c.h.b16 %v354
        %v400 = vunpack.c.l.b16 %v355
        %v401 = vunpack.c.h.b16 %v355
        %v402 = vunpack.c.l.b16 %v356
        %v403 = vunpack.c.h.b16 %v356
        %v404 = vunpack.c.l.b16 %v357
        %v405 = vunpack.c.h.b16 %v357
        %v406 = vunpack.c.l.b16 %v358
        %v407 = vunpack.c.h.b16 %v358
        %v408 = vunpack.c.l.b16 %v359
        %v409 = vunpack.c.h.b16 %v359
        %v410 = vunpack.c.l.b16 %v360
        %v411 = vunpack.c.h.b16 %v360
        %v412 = vunpack.c.l.b16 %v361
        %v413 = vunpack.c.h.b16 %v361
        %v414 = vunpack.c.l.b16 %v362
        %v415 = vunpack.c.h.b16 %v362
        %v416 = vunpack.c.l.b16 %v363
        %v417 = vunpack.c.h.b16 %v363
        %v418 = vunpack.c.l.b16 %v364
        %v419 = vunpack.c.h.b16 %v364
        %v420 = vunpack.c.l.b16 %v365
        %v421 = vunpack.c.h.b16 %v365
        %v422 = vunpack.c.l.b16 %v366
        %v423 = vunpack.c.h.b16 %v366
        %v424 = vunpack.c.l.b16 %v367
        %v425 = vunpack.c.h.b16 %v367
        %v426 = vunpack.c.l.b16 %v368
        %v427 = vunpack.c.h.b16 %v368
        %v428 = vunpack.c.l.b16 %v369
        %v429 = vunpack.c.h.b16 %v369
        %v430 = vpack.c.b16 %v400, %v398
        %v431 = vpack.c.b16 %v401, %v399
        %v432 = vpack.c.b16 %v404, %v402
        %v433 = vpack.c.b16 %v405, %v403
        %v434 = vpack.c.b16 %v408, %v406
        %v435 = vpack.c.b16 %v409, %v407
        %v436 = vpack.c.b16 %v412, %v410
        %v437 = vpack.c.b16 %v413, %v411
        %v438 = vpack.c.b16 %v416, %v414
        %v439 = vpack.c.b16 %v417, %v415
        %v440 = vpack.c.b16 %v420, %v418
        %v441 = vpack.c.b16 %v421, %v419
        %v442 = vpack.c.b16 %v424, %v422
        %v443 = vpack.c.b16 %v425, %v423
        %v444 = vpack.c.b16 %v428, %v426
        %v445 = vpack.c.b16 %v429, %v427
        %462 = vmatprep.subr.bf16.mxu0 %v445
        %463 = vmatpush1.bf16.msra.mxu0 %v444
        %464 = vmatprep.subr.bf16.mxu0 %v443
        %465 = vmatpush1.bf16.msra.mxu0 %v442
        %466 = vmatprep.subr.bf16.mxu0 %v441
        %467 = vmatpush1.bf16.msra.mxu0 %v440
        %468 = vmatprep.subr.bf16.mxu0 %v439
        %469 = vmatpush1.bf16.msra.mxu0 %v438
        %470 = vmatprep.subr.bf16.mxu0 %v437
        %471 = vmatpush1.bf16.msra.mxu0 %v436
        %472 = vmatprep.subr.bf16.mxu0 %v435
        %473 = vmatpush1.bf16.msra.mxu0 %v434
        %474 = vmatprep.subr.bf16.mxu0 %v433
        %475 = vmatpush1.bf16.msra.mxu0 %v432
        %476 = vmatprep.subr.bf16.mxu0 %v431
        %477 = vmatpush1.bf16.msra.mxu0 %v430
        %478 = vmatprep.subr.bf16.mxu0 0
        %479 = vmatpush2.bf16.msra.mxu0 0
        %480 = vmatprep.subr.bf16.mxu0 0
        %481 = vmatpush2.bf16.msra.mxu0 0
        %482 = vmatprep.subr.bf16.mxu0 0
        %483 = vmatpush2.bf16.msra.mxu0 0
        %484 = vmatprep.subr.bf16.mxu0 0
        %485 = vmatpush2.bf16.msra.mxu0 0
        %486 = vmatprep.subr.bf16.mxu0 0
        %487 = vmatpush2.bf16.msra.mxu0 0
        %488 = vmatprep.subr.bf16.mxu0 0
        %489 = vmatpush2.bf16.msra.mxu0 0
        %490 = vmatprep.subr.bf16.mxu0 0
        %491 = vmatpush2.bf16.msra.mxu0 0
        %492 = vmatprep.subr.bf16.mxu0 0
        %493 = vmatpush2.bf16.msra.mxu0 0
        %494 = vmatprep.mubr.bf16.mxu0 0
        %495 = vmatmul.mubr.bf16.gmra.mxu0 %v353
        %v496 = vpop.f32.mrf.mxu0
        %v497 = vadd.f32 %v375, %v496
        %v498 = vpop.f32.mrf.mxu0
        %v499 = vadd.f32 %v379, %v498
        %v500 = vpop.f32.mrf.mxu0
        %v501 = vpop.f32.mrf.mxu0
        %502 = vdwg.mxu0
        %v503 = vmax.f32 %v497, 0.0
        %v504 = vmax.f32 %v499, 0.0
        %v505 = vpack.c.bf16 %v503, %v503
        %v506 = vpack.c.bf16 %v504, %v504
        %v507 = vld [vmem:[#allocation7] sm:$0xf]
        %v508 = vld [vmem:[#allocation7 + $0x4] sm:$0xf]
        %v509 = vld [vmem:[#allocation7 + $0x8] sm:$0xf]
        %v510 = vld [vmem:[#allocation7 + $0xc] sm:$0xf]
        %v511 = vld [vmem:[#allocation7 + $0x10] sm:$0xf]
        %v512 = vld [vmem:[#allocation7 + $0x14] sm:$0xf]
        %v513 = vld [vmem:[#allocation7 + $0x18] sm:$0xf]
        %v514 = vld [vmem:[#allocation7 + $0x1c] sm:$0xf]
        %v515 = vld [vmem:[#allocation7 + $0x20] sm:$0xf]
        %v516 = vld [vmem:[#allocation7 + $0x24] sm:$0xf]
        %v517 = vld [vmem:[#allocation7 + $0x28] sm:$0xf]
        %v518 = vld [vmem:[#allocation7 + $0x2c] sm:$0xf]
        %v519 = vld [vmem:[#allocation7 + $0x30] sm:$0xf]
        %v520 = vld [vmem:[#allocation7 + $0x34] sm:$0xf]
        %v521 = vld [vmem:[#allocation7 + $0x38] sm:$0xf]
        %v522 = vld [vmem:[#allocation7 + $0x3c] sm:$0xf]
        %v523 = vld [vmem:[#allocation7 + $0x40] sm:$0xf]
        %v524 = vld [vmem:[#allocation7 + $0x44] sm:$0xf]
        %v525 = vld [vmem:[#allocation7 + $0x48] sm:$0xf]
        %v526 = vld [vmem:[#allocation7 + $0x4c] sm:$0xf]
        %v527 = vld [vmem:[#allocation7 + $0x50] sm:$0xf]
        %v528 = vld [vmem:[#allocation7 + $0x54] sm:$0xf]
        %v529 = vld [vmem:[#allocation7 + $0x58] sm:$0xf]
        %v530 = vld [vmem:[#allocation7 + $0x5c] sm:$0xf]
        %v531 = vld [vmem:[#allocation7 + $0x60] sm:$0xf]
        %v532 = vld [vmem:[#allocation7 + $0x64] sm:$0xf]
        %v533 = vld [vmem:[#allocation7 + $0x68] sm:$0xf]
        %v534 = vld [vmem:[#allocation7 + $0x6c] sm:$0xf]
        %v535 = vld [vmem:[#allocation7 + $0x70] sm:$0xf]
        %v536 = vld [vmem:[#allocation7 + $0x74] sm:$0xf]
        %v537 = vld [vmem:[#allocation7 + $0x78] sm:$0xf]
        %v538 = vld [vmem:[#allocation7 + $0x7c] sm:$0xf]
        %v539 = vld [vmem:[%s4] sm:$0x1]
        %v541 = vlaneseq
        %v542 = vshrl.u32 %v541, 7
        %v543 = vsub.s32 0, %v542
        %v544 = vrot.slane %v539, %v543
        %v578 = vunpack.c.l.b16 %v507
        %v579 = vunpack.c.l.b16 %v508
        %v580 = vunpack.c.l.b16 %v509
        %v581 = vunpack.c.l.b16 %v510
        %v582 = vunpack.c.l.b16 %v511
        %v583 = vunpack.c.l.b16 %v512
        %v584 = vunpack.c.l.b16 %v513
        %v585 = vunpack.c.l.b16 %v514
        %v586 = vunpack.c.l.b16 %v515
        %v587 = vunpack.c.l.b16 %v516
        %v588 = vunpack.c.l.b16 %v517
        %v589 = vunpack.c.l.b16 %v518
        %v590 = vunpack.c.l.b16 %v519
        %v591 = vunpack.c.l.b16 %v520
        %v592 = vunpack.c.l.b16 %v521
        %v593 = vunpack.c.l.b16 %v522
        %v594 = vunpack.c.l.b16 %v523
        %v595 = vunpack.c.l.b16 %v524
        %v596 = vunpack.c.l.b16 %v525
        %v597 = vunpack.c.l.b16 %v526
        %v598 = vunpack.c.l.b16 %v527
        %v599 = vunpack.c.l.b16 %v528
        %v600 = vunpack.c.l.b16 %v529
        %v601 = vunpack.c.l.b16 %v530
        %v602 = vunpack.c.l.b16 %v531
        %v603 = vunpack.c.l.b16 %v532
        %v604 = vunpack.c.l.b16 %v533
        %v605 = vunpack.c.l.b16 %v534
        %v606 = vunpack.c.l.b16 %v535
        %v607 = vunpack.c.l.b16 %v536
        %v608 = vunpack.c.l.b16 %v537
        %v609 = vunpack.c.l.b16 %v538
        %v610 = vpack.c.b16 %v579, %v578
        %v611 = vpack.c.b16 %v581, %v580
        %v612 = vpack.c.b16 %v583, %v582
        %v613 = vpack.c.b16 %v585, %v584
        %v614 = vpack.c.b16 %v587, %v586
        %v615 = vpack.c.b16 %v589, %v588
        %v616 = vpack.c.b16 %v591, %v590
        %v617 = vpack.c.b16 %v593, %v592
        %v618 = vpack.c.b16 %v595, %v594
        %v619 = vpack.c.b16 %v597, %v596
        %v620 = vpack.c.b16 %v599, %v598
        %v621 = vpack.c.b16 %v601, %v600
        %v622 = vpack.c.b16 %v603, %v602
        %v623 = vpack.c.b16 %v605, %v604
        %v624 = vpack.c.b16 %v607, %v606
        %v625 = vpack.c.b16 %v609, %v608
        %642 = vmatprep.subr.bf16.mxu0 0
        %643 = vmatpush1.bf16.msra.mxu0 %v617
        %644 = vmatprep.subr.bf16.mxu0 0
        %645 = vmatpush1.bf16.msra.mxu0 %v616
        %646 = vmatprep.subr.bf16.mxu0 0
        %647 = vmatpush1.bf16.msra.mxu0 %v615
        %648 = vmatprep.subr.bf16.mxu0 0
        %649 = vmatpush1.bf16.msra.mxu0 %v614
        %650 = vmatprep.subr.bf16.mxu0 0
        %651 = vmatpush1.bf16.msra.mxu0 %v613
        %652 = vmatprep.subr.bf16.mxu0 0
        %653 = vmatpush1.bf16.msra.mxu0 %v612
        %654 = vmatprep.subr.bf16.mxu0 0
        %655 = vmatpush1.bf16.msra.mxu0 %v611
        %656 = vmatprep.subr.bf16.mxu0 0
        %657 = vmatpush1.bf16.msra.mxu0 %v610
        %658 = vmatprep.subr.bf16.mxu0 0
        %659 = vmatpush2.bf16.msra.mxu0 %v625
        %660 = vmatprep.subr.bf16.mxu0 0
        %661 = vmatpush2.bf16.msra.mxu0 %v624
        %662 = vmatprep.subr.bf16.mxu0 0
        %663 = vmatpush2.bf16.msra.mxu0 %v623
        %664 = vmatprep.subr.bf16.mxu0 0
        %665 = vmatpush2.bf16.msra.mxu0 %v622
        %666 = vmatprep.subr.bf16.mxu0 0
        %667 = vmatpush2.bf16.msra.mxu0 %v621
        %668 = vmatprep.subr.bf16.mxu0 0
        %669 = vmatpush2.bf16.msra.mxu0 %v620
        %670 = vmatprep.subr.bf16.mxu0 0
        %671 = vmatpush2.bf16.msra.mxu0 %v619
        %672 = vmatprep.subr.bf16.mxu0 0
        %673 = vmatpush2.bf16.msra.mxu0 %v618
        %674 = vmatprep.mubr.bf16.mxu0 %v506
        %675 = vmatmul.mubr.bf16.gmra.mxu0 %v505
        %v676 = vpop.f32.mrf.mxu0
        %v677 = vadd.f32 %v544, %v676
        %v678 = vpop.f32.mrf.mxu0
        %v679 = vpop.f32.mrf.mxu0
        %v680 = vpop.f32.mrf.mxu0
        %681 = vdwg.mxu0
        %v682 = vadd.f32 %v677, %v324
        %683 = vst [vmem:[%s322] sm:$0xff] %v682
        %s684 = sand.u32 %s185, 1
        %s685 = scalar_lea.sflag [#allocation4], %s684
        %s686 = sand.u32 %s185, 1
        %s687 = smul.addr %s686, 8
        %s688 = scalar_lea.vmem [#allocation8], %s687
        // Predicated region
        $region61: #{tpu_custom_call.1} parent=47 // pred_check
          %p689 = pneg %p195
        $region62: #{tpu_custom_call.1} parent=47 // pred_check_branch
          %691 = sbr.rel (%p689) target = $region64
        $region63: #{tpu_custom_call.1} parent=47 // pred_region
          %s693 = ssub.s32 128, 128
          %694 = vsyncadd %s685, %s693
          %s695 = smul.addr %s25, 128
          %s696 = scalar_lea.hbm %s7, %s695
          %s698 = sshll.u32 %s688, 4
          %s699 = int_to_ptr.vmem [resolvable:$true] %s698
          %701 = dma.vmem_to_hbm [thread:$0]  %s699, 128, %s696, %s685
        $region64: #{tpu_custom_call.1} parent=47 // pred_fallthru
          _
      $region48: #{tpu_custom_call.1} parent=5 // pred_fallthru
        _
      %p702 = scmp.le.s32.totalorder 2, %s20
      // Predicated region
      $region65: #{tpu_custom_call.1} parent=5 // pred_check
        %p703 = pneg %p702
      $region66: #{tpu_custom_call.1} parent=5 // pred_check_branch
        %705 = sbr.rel (%p703) target = $region68
      $region67: #{tpu_custom_call.1} parent=5 // pred_region
        %s706 = ssub.s32 %s20, 2
        // Predicated region
        $region69: #{tpu_custom_call.1} parent=67 // pred_check
          %p707 = pneg %p201
        $region70: #{tpu_custom_call.1} parent=67 // pred_check_branch
          %709 = sbr.rel (%p707) target = $region72
        $region71: #{tpu_custom_call.1} parent=67 // pred_region
          %s710 = sand.u32 %s186, 1
          %s711 = scalar_lea.sflag [#allocation4], %s710
          %s712 = sand.u32 %s186, 1
          %s713 = smul.addr %s712, 8
          %s714 = scalar_lea.vmem [#allocation8], %s713
          %715 = dma.done %s711, 128
        $region72: #{tpu_custom_call.1} parent=67 // pred_fallthru
          _
      $region68: #{tpu_custom_call.1} parent=5 // pred_fallthru
        _
    $region6: #{tpu_custom_call.1} parent=1 // loop_footer
      %s24 = sadd.s32 1, %s20
    $region7: #{tpu_custom_call.1} parent=1 // loop_footer_branch
      %19 = sbr.rel target = $region3
    $region8: #{tpu_custom_call.1} parent=1 // loop_exit
      _
    %716 = vsyncpa [#allocation3], 1
    %s717 = scalar_lea.sflag [#allocation3], 1
    %718 = vsyncpa %s717, 1
    %719 = vsyncpa [#allocation6], 1
    %720 = vsyncpa [#allocation4], 1
    %s721 = scalar_lea.sflag [#allocation4], 1
    %722 = vsyncpa %s721, 1

</llo_original>
